<compile_context>
chip_gen: v5e
topology: v5e:2x2
jax: 0.10.0
libtpu: 0.0.40
codegen_flags: <defaults>
</compile_context>

<pallas_src>
import jax
import jax.numpy as jnp
from jax.experimental import pallas as pl
from jax.experimental.pallas import tpu as pltpu

_IN = 28 * 28          # 784
_H1, _H2 = 256, 128
_LATENT = 3
_LATENT_PAD = 128      # lane-dense padded latent width


def _ae_kernel(x_ref,
               w1_ref, b1_ref, w2_ref, b2_ref, w3_ref, b3_ref,
               w4_ref, b4_ref, w5_ref, b5_ref, w6_ref, b6_ref,
               y_ref, z_ref):
    """One batch tile of the full forward pass (6 matmuls + ReLUs), weights VMEM-resident."""
    x = x_ref[...]

    def dense_relu(h, w_ref, b_ref):
        # Weights are bf16 in VMEM; upcast once per tile and accumulate in f32.
        out = jnp.dot(h, w_ref[...].astype(jnp.float32),
                      preferred_element_type=jnp.float32) + b_ref[...]
        return jnp.maximum(out, 0.0)

    # ---- encoder ----
    h = dense_relu(x, w1_ref, b1_ref)        # (TB, 256)
    h = dense_relu(h, w2_ref, b2_ref)        # (TB, 128)
    z = dense_relu(h, w3_ref, b3_ref)        # (TB, 128)  cols >= 3 are exactly 0

    # ---- decoder ----
    h = dense_relu(z, w4_ref, b4_ref)        # (TB, 128)  (zero rows of w4 kill padded cols)
    h = dense_relu(h, w5_ref, b5_ref)        # (TB, 256)
    y = dense_relu(h, w6_ref, b6_ref)        # (TB, 784)

    y_ref[...] = y.astype(y_ref.dtype)
    z_ref[...] = z.astype(z_ref.dtype)


def _prepare_params(params):
    """Pad the latent dim to 128 and quantize weights to bf16 (biases stay f32)."""
    (w1, b1), (w2, b2), (w3, b3), (w4, b4), (w5, b5), (w6, b6) = params
    pad = _LATENT_PAD - _LATENT
    w3p = jnp.pad(w3, ((0, 0), (0, pad)))            # (128, 128): cols >= 3 zero
    b3p = jnp.pad(b3, ((0, 0), (0, pad)))            # (1, 128)
    w4p = jnp.pad(w4, ((0, pad), (0, 0)))            # (128, 128): rows >= 3 zero
    ws = [w1, w2, w3p, w4p, w5, w6]
    bs = [b1, b2, b3p, b4, b5, b6]
    ws = [w.astype(jnp.bfloat16) for w in ws]
    bs = [b.astype(jnp.float32) for b in bs]
    flat = []
    for w, b in zip(ws, bs):
        flat.extend([w, b])
    return tuple(flat)


def general_ae_vis_forward(x, params):
    """x: (B, 1, 28, 28) float32. Returns (y (B,1,28,28), latent (B,3))."""
    B = x.shape[0]
    x_flat = x.reshape(B, _IN).astype(jnp.float32)

    flat_params = _prepare_params(params)
    inputs = (x_flat,) + flat_params

    # Batch tile: MXU-granule sized (512 covers v5e's 4x128 and v6e/v7x's 2x256 MXUs);
    # for small B use the full batch (full-extent block is exempt from (8,128) rule).
    TB = B if B <= 512 else 512
    grid = (pl.cdiv(B, TB),)

    def resident(arr):  # weights/biases: same block every iteration -> stays in VMEM
        return pl.BlockSpec(arr.shape, lambda i: (0, 0))

    in_specs = [pl.BlockSpec((TB, _IN), lambda i: (i, 0))]
    in_specs += [resident(a) for a in flat_params]

    out_specs = (
        pl.BlockSpec((TB, _IN), lambda i: (i, 0)),
        pl.BlockSpec((TB, _LATENT_PAD), lambda i: (i, 0)),
    )
    out_shape = (
        jax.ShapeDtypeStruct((B, _IN), jnp.float32),
        jax.ShapeDtypeStruct((B, _LATENT_PAD), jnp.float32),
    )

    y_flat, z_pad = pl.pallas_call(
        _ae_kernel,
        grid=grid,
        in_specs=in_specs,
        out_specs=out_specs,
        out_shape=out_shape,
        compiler_params=pltpu.CompilerParams(
            dimension_semantics=("parallel",),
            vmem_limit_bytes=32 << 20,
        ),
    )(*inputs)

    y = y_flat.reshape(B, 1, 28, 28)
    latent = z_pad[:, :_LATENT]
    return y, latent


def init_params(key):
    """Deterministic init. Weights stored as (in, out) so kernel does x @ W + b
    (equivalent to PyTorch's x @ W.T + b with W of shape (out, in))."""
    dims = [(_IN, _H1), (_H1, _H2), (_H2, _LATENT),
            (_LATENT, _H2), (_H2, _H1), (_H1, _IN)]
    params = []
    for i, (d_in, d_out) in enumerate(dims):
        kw, kb = jax.random.split(jax.random.fold_in(key, i))
        bound = 1.0 / jnp.sqrt(d_in)
        w = jax.random.uniform(kw, (d_in, d_out), jnp.float32, -bound, bound)
        b = jax.random.uniform(kb, (1, d_out), jnp.float32, -bound, bound)
        params.append((w, b))
    return params


def _reference_forward(x, params):
    """Plain-JAX reference using the same bf16-quantized weights the kernel sees."""
    B = x.shape[0]
    h = x.reshape(B, _IN).astype(jnp.float32)
    acts = []
    for (w, b) in params:
        wq = w.astype(jnp.bfloat16).astype(jnp.float32)
        h = jnp.maximum(h @ wq + b.astype(jnp.float32), 0.0)
        acts.append(h)
    return acts[-1].reshape(B, 1, 28, 28), acts[2]


if __name__ == "__main__":
    key = jax.random.PRNGKey(0)
    k_x, k_p = jax.random.split(key)

    B = 8
    x = jax.random.uniform(k_x, (B, 1, 28, 28), jnp.float32)
    params = init_params(k_p)

    y, latent = general_ae_vis_forward(x, params)
    y = jax.block_until_ready(y)
    latent = jax.block_until_ready(latent)

    # Correctness check against plain-JAX reference (same bf16-quantized weights).
    y_ref, z_ref = _reference_forward(x, params)
    assert y.shape == (B, 1, 28, 28) and latent.shape == (B, _LATENT)
    assert jnp.allclose(y, y_ref, atol=2e-3, rtol=2e-3)
    assert jnp.allclose(latent, z_ref, atol=2e-3, rtol=2e-3)

    print("KERNEL_OK")
</pallas_src>

<mosaic_0001>
module attributes {stable_mosaic.version = 11 : i64} {
  func.func @_ae_kernel(%arg0: i32, %arg1: memref<8x784xf32, #tpu.memory_space<vmem>>, %arg2: memref<784x256xbf16, #tpu.memory_space<vmem>>, %arg3: memref<1x256xf32, #tpu.memory_space<vmem>>, %arg4: memref<256x128xbf16, #tpu.memory_space<vmem>>, %arg5: memref<1x128xf32, #tpu.memory_space<vmem>>, %arg6: memref<128x128xbf16, #tpu.memory_space<vmem>>, %arg7: memref<1x128xf32, #tpu.memory_space<vmem>>, %arg8: memref<128x128xbf16, #tpu.memory_space<vmem>>, %arg9: memref<1x128xf32, #tpu.memory_space<vmem>>, %arg10: memref<128x256xbf16, #tpu.memory_space<vmem>>, %arg11: memref<1x256xf32, #tpu.memory_space<vmem>>, %arg12: memref<256x784xbf16, #tpu.memory_space<vmem>>, %arg13: memref<1x784xf32, #tpu.memory_space<vmem>>, %arg14: memref<8x784xf32, #tpu.memory_space<vmem>>, %arg15: memref<8x128xf32, #tpu.memory_space<vmem>>) attributes {dimension_semantics = [#tpu.dimension_semantics<parallel>], iteration_bounds = array<i64: 1>, scalar_prefetch = 0 : i64, scratch_operands = 0 : i64, tpu.core_type = #tpu.core_type<tc>, window_params = [{transform_indices = @transform_0, window_bounds = array<i64: 8, 784>}, {pipeline_mode = #tpu.pipeline_mode<synchronous>, transform_indices = @transform_1, window_bounds = array<i64: 784, 256>}, {pipeline_mode = #tpu.pipeline_mode<synchronous>, transform_indices = @transform_2, window_bounds = array<i64: 1, 256>}, {pipeline_mode = #tpu.pipeline_mode<synchronous>, transform_indices = @transform_3, window_bounds = array<i64: 256, 128>}, {pipeline_mode = #tpu.pipeline_mode<synchronous>, transform_indices = @transform_4, window_bounds = array<i64: 1, 128>}, {pipeline_mode = #tpu.pipeline_mode<synchronous>, transform_indices = @transform_5, window_bounds = array<i64: 128, 128>}, {pipeline_mode = #tpu.pipeline_mode<synchronous>, transform_indices = @transform_6, window_bounds = array<i64: 1, 128>}, {pipeline_mode = #tpu.pipeline_mode<synchronous>, transform_indices = @transform_7, window_bounds = array<i64: 128, 128>}, {pipeline_mode = #tpu.pipeline_mode<synchronous>, transform_indices = @transform_8, window_bounds = array<i64: 1, 128>}, {pipeline_mode = #tpu.pipeline_mode<synchronous>, transform_indices = @transform_9, window_bounds = array<i64: 128, 256>}, {pipeline_mode = #tpu.pipeline_mode<synchronous>, transform_indices = @transform_10, window_bounds = array<i64: 1, 256>}, {pipeline_mode = #tpu.pipeline_mode<synchronous>, transform_indices = @transform_11, window_bounds = array<i64: 256, 784>}, {pipeline_mode = #tpu.pipeline_mode<synchronous>, transform_indices = @transform_12, window_bounds = array<i64: 1, 784>}, {transform_indices = @transform_13, window_bounds = array<i64: 8, 784>}, {transform_indices = @transform_14, window_bounds = array<i64: 8, 128>}]} {
    %c0 = arith.constant 0 : index
    %c0_0 = arith.constant 0 : index
    %0 = vector.load %arg1[%c0, %c0_0] : memref<8x784xf32, #tpu.memory_space<vmem>>, vector<8x784xf32>
    %c0_1 = arith.constant 0 : index
    %c0_2 = arith.constant 0 : index
    %1 = vector.load %arg2[%c0_1, %c0_2] : memref<784x256xbf16, #tpu.memory_space<vmem>>, vector<784x256xbf16>
    %2 = arith.extf %1 : vector<784x256xbf16> to vector<784x256xf32>
    %cst = arith.constant dense<0.000000e+00> : vector<8x256xf32>
    %3 = tpu.matmul %0, %2, %cst {dimension_numbers = #tpu.dot_dimension_numbers<[1], [0], [0], [1], [0, 0, 1, 1], [], []>} : vector<8x784xf32>, vector<784x256xf32>, vector<8x256xf32> -> vector<8x256xf32>
    %c0_3 = arith.constant 0 : index
    %c0_4 = arith.constant 0 : index
    %4 = vector.load %arg3[%c0_3, %c0_4] : memref<1x256xf32, #tpu.memory_space<vmem>>, vector<1x256xf32>
    %5 = vector.broadcast %4 : vector<1x256xf32> to vector<8x256xf32>
    %6 = arith.addf %3, %5 : vector<8x256xf32>
    %cst_5 = arith.constant 0.000000e+00 : f32
    %7 = vector.broadcast %cst_5 : f32 to vector<8x256xf32>
    %8 = arith.maximumf %6, %7 : vector<8x256xf32>
    %c0_6 = arith.constant 0 : index
    %c0_7 = arith.constant 0 : index
    %9 = vector.load %arg4[%c0_6, %c0_7] : memref<256x128xbf16, #tpu.memory_space<vmem>>, vector<256x128xbf16>
    %10 = arith.extf %9 : vector<256x128xbf16> to vector<256x128xf32>
    %cst_8 = arith.constant dense<0.000000e+00> : vector<8x128xf32>
    %11 = tpu.matmul %8, %10, %cst_8 {dimension_numbers = #tpu.dot_dimension_numbers<[1], [0], [0], [1], [0, 0, 1, 1], [], []>} : vector<8x256xf32>, vector<256x128xf32>, vector<8x128xf32> -> vector<8x128xf32>
    %c0_9 = arith.constant 0 : index
    %c0_10 = arith.constant 0 : index
    %12 = vector.load %arg5[%c0_9, %c0_10] : memref<1x128xf32, #tpu.memory_space<vmem>>, vector<1x128xf32>
    %13 = vector.broadcast %12 : vector<1x128xf32> to vector<8x128xf32>
    %14 = arith.addf %11, %13 : vector<8x128xf32>
    %cst_11 = arith.constant 0.000000e+00 : f32
    %15 = vector.broadcast %cst_11 : f32 to vector<8x128xf32>
    %16 = arith.maximumf %14, %15 : vector<8x128xf32>
    %c0_12 = arith.constant 0 : index
    %c0_13 = arith.constant 0 : index
    %17 = vector.load %arg6[%c0_12, %c0_13] : memref<128x128xbf16, #tpu.memory_space<vmem>>, vector<128x128xbf16>
    %18 = arith.extf %17 : vector<128x128xbf16> to vector<128x128xf32>
    %cst_14 = arith.constant dense<0.000000e+00> : vector<8x128xf32>
    %19 = tpu.matmul %16, %18, %cst_14 {dimension_numbers = #tpu.dot_dimension_numbers<[1], [0], [0], [1], [0, 0, 1, 1], [], []>} : vector<8x128xf32>, vector<128x128xf32>, vector<8x128xf32> -> vector<8x128xf32>
    %c0_15 = arith.constant 0 : index
    %c0_16 = arith.constant 0 : index
    %20 = vector.load %arg7[%c0_15, %c0_16] : memref<1x128xf32, #tpu.memory_space<vmem>>, vector<1x128xf32>
    %21 = vector.broadcast %20 : vector<1x128xf32> to vector<8x128xf32>
    %22 = arith.addf %19, %21 : vector<8x128xf32>
    %cst_17 = arith.constant 0.000000e+00 : f32
    %23 = vector.broadcast %cst_17 : f32 to vector<8x128xf32>
    %24 = arith.maximumf %22, %23 : vector<8x128xf32>
    %c0_18 = arith.constant 0 : index
    %c0_19 = arith.constant 0 : index
    %25 = vector.load %arg8[%c0_18, %c0_19] : memref<128x128xbf16, #tpu.memory_space<vmem>>, vector<128x128xbf16>
    %26 = arith.extf %25 : vector<128x128xbf16> to vector<128x128xf32>
    %cst_20 = arith.constant dense<0.000000e+00> : vector<8x128xf32>
    %27 = tpu.matmul %24, %26, %cst_20 {dimension_numbers = #tpu.dot_dimension_numbers<[1], [0], [0], [1], [0, 0, 1, 1], [], []>} : vector<8x128xf32>, vector<128x128xf32>, vector<8x128xf32> -> vector<8x128xf32>
    %c0_21 = arith.constant 0 : index
    %c0_22 = arith.constant 0 : index
    %28 = vector.load %arg9[%c0_21, %c0_22] : memref<1x128xf32, #tpu.memory_space<vmem>>, vector<1x128xf32>
    %29 = vector.broadcast %28 : vector<1x128xf32> to vector<8x128xf32>
    %30 = arith.addf %27, %29 : vector<8x128xf32>
    %cst_23 = arith.constant 0.000000e+00 : f32
    %31 = vector.broadcast %cst_23 : f32 to vector<8x128xf32>
    %32 = arith.maximumf %30, %31 : vector<8x128xf32>
    %c0_24 = arith.constant 0 : index
    %c0_25 = arith.constant 0 : index
    %33 = vector.load %arg10[%c0_24, %c0_25] : memref<128x256xbf16, #tpu.memory_space<vmem>>, vector<128x256xbf16>
    %34 = arith.extf %33 : vector<128x256xbf16> to vector<128x256xf32>
    %cst_26 = arith.constant dense<0.000000e+00> : vector<8x256xf32>
    %35 = tpu.matmul %32, %34, %cst_26 {dimension_numbers = #tpu.dot_dimension_numbers<[1], [0], [0], [1], [0, 0, 1, 1], [], []>} : vector<8x128xf32>, vector<128x256xf32>, vector<8x256xf32> -> vector<8x256xf32>
    %c0_27 = arith.constant 0 : index
    %c0_28 = arith.constant 0 : index
    %36 = vector.load %arg11[%c0_27, %c0_28] : memref<1x256xf32, #tpu.memory_space<vmem>>, vector<1x256xf32>
    %37 = vector.broadcast %36 : vector<1x256xf32> to vector<8x256xf32>
    %38 = arith.addf %35, %37 : vector<8x256xf32>
    %cst_29 = arith.constant 0.000000e+00 : f32
    %39 = vector.broadcast %cst_29 : f32 to vector<8x256xf32>
    %40 = arith.maximumf %38, %39 : vector<8x256xf32>
    %c0_30 = arith.constant 0 : index
    %c0_31 = arith.constant 0 : index
    %41 = vector.load %arg12[%c0_30, %c0_31] : memref<256x784xbf16, #tpu.memory_space<vmem>>, vector<256x784xbf16>
    %42 = arith.extf %41 : vector<256x784xbf16> to vector<256x784xf32>
    %cst_32 = arith.constant dense<0.000000e+00> : vector<8x784xf32>
    %43 = tpu.matmul %40, %42, %cst_32 {dimension_numbers = #tpu.dot_dimension_numbers<[1], [0], [0], [1], [0, 0, 1, 1], [], []>} : vector<8x256xf32>, vector<256x784xf32>, vector<8x784xf32> -> vector<8x784xf32>
    %c0_33 = arith.constant 0 : index
    %c0_34 = arith.constant 0 : index
    %44 = vector.load %arg13[%c0_33, %c0_34] : memref<1x784xf32, #tpu.memory_space<vmem>>, vector<1x784xf32>
    %45 = vector.broadcast %44 : vector<1x784xf32> to vector<8x784xf32>
    %46 = arith.addf %43, %45 : vector<8x784xf32>
    %cst_35 = arith.constant 0.000000e+00 : f32
    %47 = vector.broadcast %cst_35 : f32 to vector<8x784xf32>
    %48 = arith.maximumf %46, %47 : vector<8x784xf32>
    %c0_36 = arith.constant 0 : index
    %c0_37 = arith.constant 0 : index
    %49 = vector.load %arg14[%c0_36, %c0_37] : memref<8x784xf32, #tpu.memory_space<vmem>>, vector<8x784xf32>
    tpu.vector_store %arg14[%c0_36, %c0_37], %48 {strides = array<i32>} : memref<8x784xf32, #tpu.memory_space<vmem>>, vector<8x784xf32>,
    %c0_38 = arith.constant 0 : index
    %c0_39 = arith.constant 0 : index
    %50 = vector.load %arg15[%c0_38, %c0_39] : memref<8x128xf32, #tpu.memory_space<vmem>>, vector<8x128xf32>
    tpu.vector_store %arg15[%c0_38, %c0_39], %24 {strides = array<i32>} : memref<8x128xf32, #tpu.memory_space<vmem>>, vector<8x128xf32>,
    return
  }
  func.func @transform_0(%arg0: i32) -> (i32, i32) {
    %c0_i32 = arith.constant 0 : i32
    %c0_i32_0 = arith.constant 0 : i32
    return %arg0, %c0_i32 : i32, i32
  }
  func.func @transform_1(%arg0: i32) -> (i32, i32) {
    %c0_i32 = arith.constant 0 : i32
    %c0_i32_0 = arith.constant 0 : i32
    %c0_i32_1 = arith.constant 0 : i32
    return %c0_i32, %c0_i32_0 : i32, i32
  }
  func.func @transform_2(%arg0: i32) -> (i32, i32) {
    %c0_i32 = arith.constant 0 : i32
    %c0_i32_0 = arith.constant 0 : i32
    %c0_i32_1 = arith.constant 0 : i32
    return %c0_i32, %c0_i32_0 : i32, i32
  }
  func.func @transform_3(%arg0: i32) -> (i32, i32) {
    %c0_i32 = arith.constant 0 : i32
    %c0_i32_0 = arith.constant 0 : i32
    %c0_i32_1 = arith.constant 0 : i32
    return %c0_i32, %c0_i32_0 : i32, i32
  }
  func.func @transform_4(%arg0: i32) -> (i32, i32) {
    %c0_i32 = arith.constant 0 : i32
    %c0_i32_0 = arith.constant 0 : i32
    %c0_i32_1 = arith.constant 0 : i32
    return %c0_i32, %c0_i32_0 : i32, i32
  }
  func.func @transform_5(%arg0: i32) -> (i32, i32) {
    %c0_i32 = arith.constant 0 : i32
    %c0_i32_0 = arith.constant 0 : i32
    %c0_i32_1 = arith.constant 0 : i32
    return %c0_i32, %c0_i32_0 : i32, i32
  }
  func.func @transform_6(%arg0: i32) -> (i32, i32) {
    %c0_i32 = arith.constant 0 : i32
    %c0_i32_0 = arith.constant 0 : i32
    %c0_i32_1 = arith.constant 0 : i32
    return %c0_i32, %c0_i32_0 : i32, i32
  }
  func.func @transform_7(%arg0: i32) -> (i32, i32) {
    %c0_i32 = arith.constant 0 : i32
    %c0_i32_0 = arith.constant 0 : i32
    %c0_i32_1 = arith.constant 0 : i32
    return %c0_i32, %c0_i32_0 : i32, i32
  }
  func.func @transform_8(%arg0: i32) -> (i32, i32) {
    %c0_i32 = arith.constant 0 : i32
    %c0_i32_0 = arith.constant 0 : i32
    %c0_i32_1 = arith.constant 0 : i32
    return %c0_i32, %c0_i32_0 : i32, i32
  }
  func.func @transform_9(%arg0: i32) -> (i32, i32) {
    %c0_i32 = arith.constant 0 : i32
    %c0_i32_0 = arith.constant 0 : i32
    %c0_i32_1 = arith.constant 0 : i32
    return %c0_i32, %c0_i32_0 : i32, i32
  }
  func.func @transform_10(%arg0: i32) -> (i32, i32) {
    %c0_i32 = arith.constant 0 : i32
    %c0_i32_0 = arith.constant 0 : i32
    %c0_i32_1 = arith.constant 0 : i32
    return %c0_i32, %c0_i32_0 : i32, i32
  }
  func.func @transform_11(%arg0: i32) -> (i32, i32) {
    %c0_i32 = arith.constant 0 : i32
    %c0_i32_0 = arith.constant 0 : i32
    %c0_i32_1 = arith.constant 0 : i32
    return %c0_i32, %c0_i32_0 : i32, i32
  }
  func.func @transform_12(%arg0: i32) -> (i32, i32) {
    %c0_i32 = arith.constant 0 : i32
    %c0_i32_0 = arith.constant 0 : i32
    %c0_i32_1 = arith.constant 0 : i32
    return %c0_i32, %c0_i32_0 : i32, i32
  }
  func.func @transform_13(%arg0: i32) -> (i32, i32) {
    %c0_i32 = arith.constant 0 : i32
    %c0_i32_0 = arith.constant 0 : i32
    return %arg0, %c0_i32 : i32, i32
  }
  func.func @transform_14(%arg0: i32) -> (i32, i32) {
    %c0_i32 = arith.constant 0 : i32
    %c0_i32_0 = arith.constant 0 : i32
    return %arg0, %c0_i32 : i32, i32
  }
}

</mosaic_0001>

<llo_original>
// kernel: tpu_custom_call.1
$region0: #{tpu_custom_call.1}
  #allocation0 [shape = 'u32[]', space=smem, size = 0x4, offset = 0x4, fixed_abs, tag = 'smem constant byte address 0x4 - core index']
  #allocation1 [shape = 'u32[72,128]{1,0:T(1,128)}', space=vmem, size = 0x9000, scoped, tag = 'internal scratch']
  %s0 = inlined_call_operand.vmem [shape: f32[8,784], index: 0, kind: input, shape index: {}]
  %s1 = inlined_call_operand.vmem [shape: bf16[784,256], index: 1, kind: input, shape index: {}]
  %s2 = inlined_call_operand.vmem [shape: f32[1,256], index: 2, kind: input, shape index: {}]
  %s3 = inlined_call_operand.vmem [shape: bf16[256,128], index: 3, kind: input, shape index: {}]
  %s4 = inlined_call_operand.vmem [shape: f32[1,128], index: 4, kind: input, shape index: {}]
  %s5 = inlined_call_operand.vmem [shape: bf16[128,128], index: 5, kind: input, shape index: {}]
  %s6 = inlined_call_operand.vmem [shape: f32[1,128], index: 6, kind: input, shape index: {}]
  %s7 = inlined_call_operand.vmem [shape: bf16[128,128], index: 7, kind: input, shape index: {}]
  %s8 = inlined_call_operand.vmem [shape: f32[1,128], index: 8, kind: input, shape index: {}]
  %s9 = inlined_call_operand.vmem [shape: bf16[128,256], index: 9, kind: input, shape index: {}]
  %s10 = inlined_call_operand.vmem [shape: f32[1,256], index: 10, kind: input, shape index: {}]
  %s11 = inlined_call_operand.vmem [shape: bf16[256,784], index: 11, kind: input, shape index: {}]
  %s12 = inlined_call_operand.vmem [shape: f32[1,784], index: 12, kind: input, shape index: {}]
  %s13 = inlined_call_operand.hbm [shape: f32[8,784], index: 13, kind: output, shape index: {0}]
  %s14 = inlined_call_operand.hbm [shape: f32[8,128], index: 14, kind: output, shape index: {1}]
  %15 = xla_tuple %s13, %s14
  %s16 = sld [smem:[#allocation0]]
  $region70: #{tpu_custom_call.1} parent=0
    _
  %s18 = ssub.s32 1, %s16
  %s19 = scalar_select 0, %s18, %s16
  $region1: #{tpu_custom_call.1} parent=0
    #allocation2 [shape = 'u8[28672]{0}', space=vmem, size = 0x7000, scoped, tag = 'output window, operand 0, single buffered']
    #allocation3 [shape = 's32[1]{0}', space=sflag, size = 0x4, scoped, tag = 'scoped memory for tpu_custom_call.1']
    #allocation4 [shape = 'u8[4096]{0}', space=vmem, size = 0x1000, scoped, tag = 'output window, operand 1, single buffered']
    #allocation5 [shape = 's32[1]{0}', space=sflag, size = 0x4, scoped, tag = 'scoped memory for tpu_custom_call.1']
    %20 = vsyncpa [#allocation3], 0
    %21 = vsyncpa [#allocation5], 0
    // Predicated region
    $region2: #{tpu_custom_call.1} parent=1 // pred_check
      _
    $region3: #{tpu_custom_call.1} parent=1 // pred_check_branch
      %23 = sbr.rel (0) target = $region5
    $region4: #{tpu_custom_call.1} parent=1 // pred_region
      _
    $region5: #{tpu_custom_call.1} parent=1 // pred_fallthru
      _
    // Predicated region
    $region6: #{tpu_custom_call.1} parent=1 // pred_check
      _
    $region7: #{tpu_custom_call.1} parent=1 // pred_check_branch
      %25 = sbr.rel (0) target = $region9
    $region8: #{tpu_custom_call.1} parent=1 // pred_region
      _
    $region9: #{tpu_custom_call.1} parent=1 // pred_fallthru
      _
    // Predicated region
    $region10: #{tpu_custom_call.1} parent=1 // pred_check
      _
    $region11: #{tpu_custom_call.1} parent=1 // pred_check_branch
      %27 = sbr.rel (0) target = $region13
    $region12: #{tpu_custom_call.1} parent=1 // pred_region
      _
    $region13: #{tpu_custom_call.1} parent=1 // pred_fallthru
      _
    // Predicated region
    $region14: #{tpu_custom_call.1} parent=1 // pred_check
      _
    $region15: #{tpu_custom_call.1} parent=1 // pred_check_branch
      %29 = sbr.rel (0) target = $region17
    $region16: #{tpu_custom_call.1} parent=1 // pred_region
      _
    $region17: #{tpu_custom_call.1} parent=1 // pred_fallthru
      _
    // Predicated region
    $region18: #{tpu_custom_call.1} parent=1 // pred_check
      _
    $region19: #{tpu_custom_call.1} parent=1 // pred_check_branch
      %31 = sbr.rel (0) target = $region21
    $region20: #{tpu_custom_call.1} parent=1 // pred_region
      _
    $region21: #{tpu_custom_call.1} parent=1 // pred_fallthru
      _
    // Predicated region
    $region22: #{tpu_custom_call.1} parent=1 // pred_check
      _
    $region23: #{tpu_custom_call.1} parent=1 // pred_check_branch
      %33 = sbr.rel (0) target = $region25
    $region24: #{tpu_custom_call.1} parent=1 // pred_region
      _
    $region25: #{tpu_custom_call.1} parent=1 // pred_fallthru
      _
    // Predicated region
    $region26: #{tpu_custom_call.1} parent=1 // pred_check
      _
    $region27: #{tpu_custom_call.1} parent=1 // pred_check_branch
      %35 = sbr.rel (0) target = $region29
    $region28: #{tpu_custom_call.1} parent=1 // pred_region
      _
    $region29: #{tpu_custom_call.1} parent=1 // pred_fallthru
      _
    // Predicated region
    $region30: #{tpu_custom_call.1} parent=1 // pred_check
      _
    $region31: #{tpu_custom_call.1} parent=1 // pred_check_branch
      %37 = sbr.rel (0) target = $region33
    $region32: #{tpu_custom_call.1} parent=1 // pred_region
      _
    $region33: #{tpu_custom_call.1} parent=1 // pred_fallthru
      _
    // Predicated region
    $region34: #{tpu_custom_call.1} parent=1 // pred_check
      _
    $region35: #{tpu_custom_call.1} parent=1 // pred_check_branch
      %39 = sbr.rel (0) target = $region37
    $region36: #{tpu_custom_call.1} parent=1 // pred_region
      _
    $region37: #{tpu_custom_call.1} parent=1 // pred_fallthru
      _
    // Predicated region
    $region38: #{tpu_custom_call.1} parent=1 // pred_check
      _
    $region39: #{tpu_custom_call.1} parent=1 // pred_check_branch
      %41 = sbr.rel (0) target = $region41
    $region40: #{tpu_custom_call.1} parent=1 // pred_region
      _
    $region41: #{tpu_custom_call.1} parent=1 // pred_fallthru
      _
    // Predicated region
    $region42: #{tpu_custom_call.1} parent=1 // pred_check
      _
    $region43: #{tpu_custom_call.1} parent=1 // pred_check_branch
      %43 = sbr.rel (0) target = $region45
    $region44: #{tpu_custom_call.1} parent=1 // pred_region
      _
    $region45: #{tpu_custom_call.1} parent=1 // pred_fallthru
      _
    // Predicated region
    $region46: #{tpu_custom_call.1} parent=1 // pred_check
      _
    $region47: #{tpu_custom_call.1} parent=1 // pred_check_branch
      %45 = sbr.rel (0) target = $region49
    $region48: #{tpu_custom_call.1} parent=1 // pred_region
      _
    $region49: #{tpu_custom_call.1} parent=1 // pred_fallthru
      _
    // Predicated region
    $region50: #{tpu_custom_call.1} parent=1 // pred_check
      _
    $region51: #{tpu_custom_call.1} parent=1 // pred_check_branch
      %47 = sbr.rel (0) target = $region53
    $region52: #{tpu_custom_call.1} parent=1 // pred_region
      _
    $region53: #{tpu_custom_call.1} parent=1 // pred_fallthru
      _
    %v48 = vld [vmem:[%s0] sm:$0xff]
    %v49 = vld [vmem:[%s0 + $0x8] sm:$0xff]
    %v50 = vld [vmem:[%s0 + $0x10] sm:$0xff]
    %v51 = vld [vmem:[%s0 + $0x18] sm:$0xff]
    %v52 = vld [vmem:[%s0 + $0x20] sm:$0xff]
    %v53 = vld [vmem:[%s0 + $0x28] sm:$0xff]
    %v54 = vld [vmem:[%s0 + $0x30] sm:$0xff]
    %v55 = vld [vmem:[%s1] sm:$0xff]
    %v56 = vld [vmem:[%s1 + $0x8] sm:$0xff]
    %v57 = vld [vmem:[%s1 + $0x10] sm:$0xff]
    %v58 = vld [vmem:[%s1 + $0x18] sm:$0xff]
    %v59 = vld [vmem:[%s1 + $0x20] sm:$0xff]
    %v60 = vld [vmem:[%s1 + $0x28] sm:$0xff]
    %v61 = vld [vmem:[%s1 + $0x30] sm:$0xff]
    %v62 = vld [vmem:[%s1 + $0x38] sm:$0xff]
    %v63 = vld [vmem:[%s1 + $0x40] sm:$0xff]
    %v64 = vld [vmem:[%s1 + $0x48] sm:$0xff]
    %v65 = vld [vmem:[%s1 + $0x50] sm:$0xff]
    %v66 = vld [vmem:[%s1 + $0x58] sm:$0xff]
    %v67 = vld [vmem:[%s1 + $0x60] sm:$0xff]
    %v68 = vld [vmem:[%s1 + $0x68] sm:$0xff]
    %v69 = vld [vmem:[%s1 + $0x70] sm:$0xff]
    %v70 = vld [vmem:[%s1 + $0x78] sm:$0xff]
    %v71 = vld [vmem:[%s1 + $0x80] sm:$0xff]
    %v72 = vld [vmem:[%s1 + $0x88] sm:$0xff]
    %v73 = vld [vmem:[%s1 + $0x90] sm:$0xff]
    %v74 = vld [vmem:[%s1 + $0x98] sm:$0xff]
    %v75 = vld [vmem:[%s1 + $0xa0] sm:$0xff]
    %v76 = vld [vmem:[%s1 + $0xa8] sm:$0xff]
    %v77 = vld [vmem:[%s1 + $0xb0] sm:$0xff]
    %v78 = vld [vmem:[%s1 + $0xb8] sm:$0xff]
    %v79 = vld [vmem:[%s1 + $0xc0] sm:$0xff]
    %v80 = vld [vmem:[%s1 + $0xc8] sm:$0xff]
    %v81 = vld [vmem:[%s1 + $0xd0] sm:$0xff]
    %v82 = vld [vmem:[%s1 + $0xd8] sm:$0xff]
    %v83 = vld [vmem:[%s1 + $0xe0] sm:$0xff]
    %v84 = vld [vmem:[%s1 + $0xe8] sm:$0xff]
    %v85 = vld [vmem:[%s1 + $0xf0] sm:$0xff]
    %v86 = vld [vmem:[%s1 + $0xf8] sm:$0xff]
    %v87 = vld [vmem:[%s1 + $0x100] sm:$0xff]
    %v88 = vld [vmem:[%s1 + $0x108] sm:$0xff]
    %v89 = vld [vmem:[%s1 + $0x110] sm:$0xff]
    %v90 = vld [vmem:[%s1 + $0x118] sm:$0xff]
    %v91 = vld [vmem:[%s1 + $0x120] sm:$0xff]
    %v92 = vld [vmem:[%s1 + $0x128] sm:$0xff]
    %v93 = vld [vmem:[%s1 + $0x130] sm:$0xff]
    %v94 = vld [vmem:[%s1 + $0x138] sm:$0xff]
    %v95 = vld [vmem:[%s1 + $0x140] sm:$0xff]
    %v96 = vld [vmem:[%s1 + $0x148] sm:$0xff]
    %v97 = vld [vmem:[%s1 + $0x150] sm:$0xff]
    %v98 = vld [vmem:[%s1 + $0x158] sm:$0xff]
    %v99 = vld [vmem:[%s1 + $0x160] sm:$0xff]
    %v100 = vld [vmem:[%s1 + $0x168] sm:$0xff]
    %v101 = vld [vmem:[%s1 + $0x170] sm:$0xff]
    %v102 = vld [vmem:[%s1 + $0x178] sm:$0xff]
    %v103 = vld [vmem:[%s1 + $0x180] sm:$0xff]
    %v104 = vld [vmem:[%s1 + $0x188] sm:$0xff]
    %v105 = vld [vmem:[%s1 + $0x190] sm:$0xff]
    %v106 = vld [vmem:[%s1 + $0x198] sm:$0xff]
    %v107 = vld [vmem:[%s1 + $0x1a0] sm:$0xff]
    %v108 = vld [vmem:[%s1 + $0x1a8] sm:$0xff]
    %v109 = vld [vmem:[%s1 + $0x1b0] sm:$0xff]
    %v110 = vld [vmem:[%s1 + $0x1b8] sm:$0xff]
    %v111 = vld [vmem:[%s1 + $0x1c0] sm:$0xff]
    %v112 = vld [vmem:[%s1 + $0x1c8] sm:$0xff]
    %v113 = vld [vmem:[%s1 + $0x1d0] sm:$0xff]
    %v114 = vld [vmem:[%s1 + $0x1d8] sm:$0xff]
    %v115 = vld [vmem:[%s1 + $0x1e0] sm:$0xff]
    %v116 = vld [vmem:[%s1 + $0x1e8] sm:$0xff]
    %v117 = vld [vmem:[%s1 + $0x1f0] sm:$0xff]
    %v118 = vld [vmem:[%s1 + $0x1f8] sm:$0xff]
    %v119 = vld [vmem:[%s1 + $0x200] sm:$0xff]
    %v120 = vld [vmem:[%s1 + $0x208] sm:$0xff]
    %v121 = vld [vmem:[%s1 + $0x210] sm:$0xff]
    %v122 = vld [vmem:[%s1 + $0x218] sm:$0xff]
    %v123 = vld [vmem:[%s1 + $0x220] sm:$0xff]
    %v124 = vld [vmem:[%s1 + $0x228] sm:$0xff]
    %v125 = vld [vmem:[%s1 + $0x230] sm:$0xff]
    %v126 = vld [vmem:[%s1 + $0x238] sm:$0xff]
    %v127 = vld [vmem:[%s1 + $0x240] sm:$0xff]
    %v128 = vld [vmem:[%s1 + $0x248] sm:$0xff]
    %v129 = vld [vmem:[%s1 + $0x250] sm:$0xff]
    %v130 = vld [vmem:[%s1 + $0x258] sm:$0xff]
    %v131 = vld [vmem:[%s1 + $0x260] sm:$0xff]
    %v132 = vld [vmem:[%s1 + $0x268] sm:$0xff]
    %v133 = vld [vmem:[%s1 + $0x270] sm:$0xff]
    %v134 = vld [vmem:[%s1 + $0x278] sm:$0xff]
    %v135 = vld [vmem:[%s1 + $0x280] sm:$0xff]
    %v136 = vld [vmem:[%s1 + $0x288] sm:$0xff]
    %v137 = vld [vmem:[%s1 + $0x290] sm:$0xff]
    %v138 = vld [vmem:[%s1 + $0x298] sm:$0xff]
    %v139 = vld [vmem:[%s1 + $0x2a0] sm:$0xff]
    %v140 = vld [vmem:[%s1 + $0x2a8] sm:$0xff]
    %v141 = vld [vmem:[%s1 + $0x2b0] sm:$0xff]
    %v142 = vld [vmem:[%s1 + $0x2b8] sm:$0xff]
    %v143 = vld [vmem:[%s1 + $0x2c0] sm:$0xff]
    %v144 = vld [vmem:[%s1 + $0x2c8] sm:$0xff]
    %v145 = vld [vmem:[%s1 + $0x2d0] sm:$0xff]
    %v146 = vld [vmem:[%s1 + $0x2d8] sm:$0xff]
    %v147 = vld [vmem:[%s1 + $0x2e0] sm:$0xff]
    %v148 = vld [vmem:[%s1 + $0x2e8] sm:$0xff]
    %v149 = vld [vmem:[%s1 + $0x2f0] sm:$0xff]
    %v150 = vld [vmem:[%s1 + $0x2f8] sm:$0xff]
    %v151 = vld [vmem:[%s1 + $0x300] sm:$0xff]
    %v152 = vld [vmem:[%s1 + $0x308] sm:$0xff]
    %v153 = vunpack.c.l.bf16 %v55
    %v154 = vunpack.c.h.bf16 %v55
    %v155 = vunpack.c.l.bf16 %v56
    %v156 = vunpack.c.h.bf16 %v56
    %v157 = vunpack.c.l.bf16 %v57
    %v158 = vunpack.c.h.bf16 %v57
    %v159 = vunpack.c.l.bf16 %v58
    %v160 = vunpack.c.h.bf16 %v58
    %v161 = vunpack.c.l.bf16 %v59
    %v162 = vunpack.c.h.bf16 %v59
    %v163 = vunpack.c.l.bf16 %v60
    %v164 = vunpack.c.h.bf16 %v60
    %v165 = vunpack.c.l.bf16 %v61
    %v166 = vunpack.c.h.bf16 %v61
    %v167 = vunpack.c.l.bf16 %v62
    %v168 = vunpack.c.h.bf16 %v62
    %v169 = vunpack.c.l.bf16 %v63
    %v170 = vunpack.c.h.bf16 %v63
    %v171 = vunpack.c.l.bf16 %v64
    %v172 = vunpack.c.h.bf16 %v64
    %v173 = vunpack.c.l.bf16 %v65
    %v174 = vunpack.c.h.bf16 %v65
    %v175 = vunpack.c.l.bf16 %v66
    %v176 = vunpack.c.h.bf16 %v66
    %v177 = vunpack.c.l.bf16 %v67
    %v178 = vunpack.c.h.bf16 %v67
    %v179 = vunpack.c.l.bf16 %v68
    %v180 = vunpack.c.h.bf16 %v68
    %v181 = vunpack.c.l.bf16 %v69
    %v182 = vunpack.c.h.bf16 %v69
    %v183 = vunpack.c.l.bf16 %v70
    %v184 = vunpack.c.h.bf16 %v70
    %v185 = vunpack.c.l.bf16 %v71
    %v186 = vunpack.c.h.bf16 %v71
    %v187 = vunpack.c.l.bf16 %v72
    %v188 = vunpack.c.h.bf16 %v72
    %v189 = vunpack.c.l.bf16 %v73
    %v190 = vunpack.c.h.bf16 %v73
    %v191 = vunpack.c.l.bf16 %v74
    %v192 = vunpack.c.h.bf16 %v74
    %v193 = vunpack.c.l.bf16 %v75
    %v194 = vunpack.c.h.bf16 %v75
    %v195 = vunpack.c.l.bf16 %v76
    %v196 = vunpack.c.h.bf16 %v76
    %v197 = vunpack.c.l.bf16 %v77
    %v198 = vunpack.c.h.bf16 %v77
    %v199 = vunpack.c.l.bf16 %v78
    %v200 = vunpack.c.h.bf16 %v78
    %v201 = vunpack.c.l.bf16 %v79
    %v202 = vunpack.c.h.bf16 %v79
    %v203 = vunpack.c.l.bf16 %v80
    %v204 = vunpack.c.h.bf16 %v80
    %v205 = vunpack.c.l.bf16 %v81
    %v206 = vunpack.c.h.bf16 %v81
    %v207 = vunpack.c.l.bf16 %v82
    %v208 = vunpack.c.h.bf16 %v82
    %v209 = vunpack.c.l.bf16 %v83
    %v210 = vunpack.c.h.bf16 %v83
    %v211 = vunpack.c.l.bf16 %v84
    %v212 = vunpack.c.h.bf16 %v84
    %v213 = vunpack.c.l.bf16 %v85
    %v214 = vunpack.c.h.bf16 %v85
    %v215 = vunpack.c.l.bf16 %v86
    %v216 = vunpack.c.h.bf16 %v86
    %v217 = vunpack.c.l.bf16 %v87
    %v218 = vunpack.c.h.bf16 %v87
    %v219 = vunpack.c.l.bf16 %v88
    %v220 = vunpack.c.h.bf16 %v88
    %v221 = vunpack.c.l.bf16 %v89
    %v222 = vunpack.c.h.bf16 %v89
    %v223 = vunpack.c.l.bf16 %v90
    %v224 = vunpack.c.h.bf16 %v90
    %v225 = vunpack.c.l.bf16 %v91
    %v226 = vunpack.c.h.bf16 %v91
    %v227 = vunpack.c.l.bf16 %v92
    %v228 = vunpack.c.h.bf16 %v92
    %v229 = vunpack.c.l.bf16 %v93
    %v230 = vunpack.c.h.bf16 %v93
    %v231 = vunpack.c.l.bf16 %v94
    %v232 = vunpack.c.h.bf16 %v94
    %v233 = vunpack.c.l.bf16 %v95
    %v234 = vunpack.c.h.bf16 %v95
    %v235 = vunpack.c.l.bf16 %v96
    %v236 = vunpack.c.h.bf16 %v96
    %v237 = vunpack.c.l.bf16 %v97
    %v238 = vunpack.c.h.bf16 %v97
    %v239 = vunpack.c.l.bf16 %v98
    %v240 = vunpack.c.h.bf16 %v98
    %v241 = vunpack.c.l.bf16 %v99
    %v242 = vunpack.c.h.bf16 %v99
    %v243 = vunpack.c.l.bf16 %v100
    %v244 = vunpack.c.h.bf16 %v100
    %v245 = vunpack.c.l.bf16 %v101
    %v246 = vunpack.c.h.bf16 %v101
    %v247 = vunpack.c.l.bf16 %v102
    %v248 = vunpack.c.h.bf16 %v102
    %v249 = vunpack.c.l.bf16 %v103
    %v250 = vunpack.c.h.bf16 %v103
    %v251 = vunpack.c.l.bf16 %v104
    %v252 = vunpack.c.h.bf16 %v104
    %v253 = vunpack.c.l.bf16 %v105
    %v254 = vunpack.c.h.bf16 %v105
    %v255 = vunpack.c.l.bf16 %v106
    %v256 = vunpack.c.h.bf16 %v106
    %v257 = vunpack.c.l.bf16 %v107
    %v258 = vunpack.c.h.bf16 %v107
    %v259 = vunpack.c.l.bf16 %v108
    %v260 = vunpack.c.h.bf16 %v108
    %v261 = vunpack.c.l.bf16 %v109
    %v262 = vunpack.c.h.bf16 %v109
    %v263 = vunpack.c.l.bf16 %v110
    %v264 = vunpack.c.h.bf16 %v110
    %v265 = vunpack.c.l.bf16 %v111
    %v266 = vunpack.c.h.bf16 %v111
    %v267 = vunpack.c.l.bf16 %v112
    %v268 = vunpack.c.h.bf16 %v112
    %v269 = vunpack.c.l.bf16 %v113
    %v270 = vunpack.c.h.bf16 %v113
    %v271 = vunpack.c.l.bf16 %v114
    %v272 = vunpack.c.h.bf16 %v114
    %v273 = vunpack.c.l.bf16 %v115
    %v274 = vunpack.c.h.bf16 %v115
    %v275 = vunpack.c.l.bf16 %v116
    %v276 = vunpack.c.h.bf16 %v116
    %v277 = vunpack.c.l.bf16 %v117
    %v278 = vunpack.c.h.bf16 %v117
    %v279 = vunpack.c.l.bf16 %v118
    %v280 = vunpack.c.h.bf16 %v118
    %v281 = vunpack.c.l.bf16 %v119
    %v282 = vunpack.c.h.bf16 %v119
    %v283 = vunpack.c.l.bf16 %v120
    %v284 = vunpack.c.h.bf16 %v120
    %v285 = vunpack.c.l.bf16 %v121
    %v286 = vunpack.c.h.bf16 %v121
    %v287 = vunpack.c.l.bf16 %v122
    %v288 = vunpack.c.h.bf16 %v122
    %v289 = vunpack.c.l.bf16 %v123
    %v290 = vunpack.c.h.bf16 %v123
    %v291 = vunpack.c.l.bf16 %v124
    %v292 = vunpack.c.h.bf16 %v124
    %v293 = vunpack.c.l.bf16 %v125
    %v294 = vunpack.c.h.bf16 %v125
    %v295 = vunpack.c.l.bf16 %v126
    %v296 = vunpack.c.h.bf16 %v126
    %v297 = vunpack.c.l.bf16 %v127
    %v298 = vunpack.c.h.bf16 %v127
    %v299 = vunpack.c.l.bf16 %v128
    %v300 = vunpack.c.h.bf16 %v128
    %v301 = vunpack.c.l.bf16 %v129
    %v302 = vunpack.c.h.bf16 %v129
    %v303 = vunpack.c.l.bf16 %v130
    %v304 = vunpack.c.h.bf16 %v130
    %v305 = vunpack.c.l.bf16 %v131
    %v306 = vunpack.c.h.bf16 %v131
    %v307 = vunpack.c.l.bf16 %v132
    %v308 = vunpack.c.h.bf16 %v132
    %v309 = vunpack.c.l.bf16 %v133
    %v310 = vunpack.c.h.bf16 %v133
    %v311 = vunpack.c.l.bf16 %v134
    %v312 = vunpack.c.h.bf16 %v134
    %v313 = vunpack.c.l.bf16 %v135
    %v314 = vunpack.c.h.bf16 %v135
    %v315 = vunpack.c.l.bf16 %v136
    %v316 = vunpack.c.h.bf16 %v136
    %v317 = vunpack.c.l.bf16 %v137
    %v318 = vunpack.c.h.bf16 %v137
    %v319 = vunpack.c.l.bf16 %v138
    %v320 = vunpack.c.h.bf16 %v138
    %v321 = vunpack.c.l.bf16 %v139
    %v322 = vunpack.c.h.bf16 %v139
    %v323 = vunpack.c.l.bf16 %v140
    %v324 = vunpack.c.h.bf16 %v140
    %v325 = vunpack.c.l.bf16 %v141
    %v326 = vunpack.c.h.bf16 %v141
    %v327 = vunpack.c.l.bf16 %v142
    %v328 = vunpack.c.h.bf16 %v142
    %v329 = vunpack.c.l.bf16 %v143
    %v330 = vunpack.c.h.bf16 %v143
    %v331 = vunpack.c.l.bf16 %v144
    %v332 = vunpack.c.h.bf16 %v144
    %v333 = vunpack.c.l.bf16 %v145
    %v334 = vunpack.c.h.bf16 %v145
    %v335 = vunpack.c.l.bf16 %v146
    %v336 = vunpack.c.h.bf16 %v146
    %v337 = vunpack.c.l.bf16 %v147
    %v338 = vunpack.c.h.bf16 %v147
    %v339 = vunpack.c.l.bf16 %v148
    %v340 = vunpack.c.h.bf16 %v148
    %v341 = vunpack.c.l.bf16 %v149
    %v342 = vunpack.c.h.bf16 %v149
    %v343 = vunpack.c.l.bf16 %v150
    %v344 = vunpack.c.h.bf16 %v150
    %v345 = vunpack.c.l.bf16 %v151
    %v346 = vunpack.c.h.bf16 %v151
    %v347 = vunpack.c.l.bf16 %v152
    %v348 = vunpack.c.h.bf16 %v152
    %v349 = vld [vmem:[%s2] sm:$0x3]
    %v351 = vperm.slane %v349, 0
    %v352 = vperm.slane %v349, 1
    %vm355 = vcmask 130048
    %v357 = vsel %vm355, %v54, 0
    %359 = vmatpush.msra.mxu0 %v183
    %360 = vmatpush.msra.mxu0 %v181
    %361 = vmatpush.msra.mxu0 %v179
    %362 = vmatpush.msra.mxu0 %v177
    %363 = vmatpush.msra.mxu0 %v175
    %364 = vmatpush.msra.mxu0 %v173
    %365 = vmatpush.msra.mxu0 %v171
    %366 = vmatpush.msra.mxu0 %v169
    %367 = vmatpush.msra.mxu0 %v167
    %368 = vmatpush.msra.mxu0 %v165
    %369 = vmatpush.msra.mxu0 %v163
    %370 = vmatpush.msra.mxu0 %v161
    %371 = vmatpush.msra.mxu0 %v159
    %372 = vmatpush.msra.mxu0 %v157
    %373 = vmatpush.msra.mxu0 %v155
    %374 = vmatpush.msra.mxu0 %v153
    %375 = vmatmul.f32.gmra.mxu0 %v48
    %v376 = vpop.f32.mrf.mxu0
    %v377 = vadd.f32 %v351, %v376
    %378 = vdwg.mxu0
    %379 = vmatpush.msra.mxu0 %v215
    %380 = vmatpush.msra.mxu0 %v213
    %381 = vmatpush.msra.mxu0 %v211
    %382 = vmatpush.msra.mxu0 %v209
    %383 = vmatpush.msra.mxu0 %v207
    %384 = vmatpush.msra.mxu0 %v205
    %385 = vmatpush.msra.mxu0 %v203
    %386 = vmatpush.msra.mxu0 %v201
    %387 = vmatpush.msra.mxu0 %v199
    %388 = vmatpush.msra.mxu0 %v197
    %389 = vmatpush.msra.mxu0 %v195
    %390 = vmatpush.msra.mxu0 %v193
    %391 = vmatpush.msra.mxu0 %v191
    %392 = vmatpush.msra.mxu0 %v189
    %393 = vmatpush.msra.mxu0 %v187
    %394 = vmatpush.msra.mxu0 %v185
    %395 = vmatmul.f32.gmra.mxu0 %v49
    %v396 = vpop.f32.mrf.mxu0
    %v397 = vadd.f32 %v377, %v396
    %398 = vdwg.mxu0
    %399 = vmatpush.msra.mxu0 %v247
    %400 = vmatpush.msra.mxu0 %v245
    %401 = vmatpush.msra.mxu0 %v243
    %402 = vmatpush.msra.mxu0 %v241
    %403 = vmatpush.msra.mxu0 %v239
    %404 = vmatpush.msra.mxu0 %v237
    %405 = vmatpush.msra.mxu0 %v235
    %406 = vmatpush.msra.mxu0 %v233
    %407 = vmatpush.msra.mxu0 %v231
    %408 = vmatpush.msra.mxu0 %v229
    %409 = vmatpush.msra.mxu0 %v227
    %410 = vmatpush.msra.mxu0 %v225
    %411 = vmatpush.msra.mxu0 %v223
    %412 = vmatpush.msra.mxu0 %v221
    %413 = vmatpush.msra.mxu0 %v219
    %414 = vmatpush.msra.mxu0 %v217
    %415 = vmatmul.f32.gmra.mxu0 %v50
    %v416 = vpop.f32.mrf.mxu0
    %v417 = vadd.f32 %v397, %v416
    %418 = vdwg.mxu0
    %419 = vmatpush.msra.mxu0 %v279
    %420 = vmatpush.msra.mxu0 %v277
    %421 = vmatpush.msra.mxu0 %v275
    %422 = vmatpush.msra.mxu0 %v273
    %423 = vmatpush.msra.mxu0 %v271
    %424 = vmatpush.msra.mxu0 %v269
    %425 = vmatpush.msra.mxu0 %v267
    %426 = vmatpush.msra.mxu0 %v265
    %427 = vmatpush.msra.mxu0 %v263
    %428 = vmatpush.msra.mxu0 %v261
    %429 = vmatpush.msra.mxu0 %v259
    %430 = vmatpush.msra.mxu0 %v257
    %431 = vmatpush.msra.mxu0 %v255
    %432 = vmatpush.msra.mxu0 %v253
    %433 = vmatpush.msra.mxu0 %v251
    %434 = vmatpush.msra.mxu0 %v249
    %435 = vmatmul.f32.gmra.mxu0 %v51
    %v436 = vpop.f32.mrf.mxu0
    %v437 = vadd.f32 %v417, %v436
    %438 = vdwg.mxu0
    %439 = vmatpush.msra.mxu0 %v311
    %440 = vmatpush.msra.mxu0 %v309
    %441 = vmatpush.msra.mxu0 %v307
    %442 = vmatpush.msra.mxu0 %v305
    %443 = vmatpush.msra.mxu0 %v303
    %444 = vmatpush.msra.mxu0 %v301
    %445 = vmatpush.msra.mxu0 %v299
    %446 = vmatpush.msra.mxu0 %v297
    %447 = vmatpush.msra.mxu0 %v295
    %448 = vmatpush.msra.mxu0 %v293
    %449 = vmatpush.msra.mxu0 %v291
    %450 = vmatpush.msra.mxu0 %v289
    %451 = vmatpush.msra.mxu0 %v287
    %452 = vmatpush.msra.mxu0 %v285
    %453 = vmatpush.msra.mxu0 %v283
    %454 = vmatpush.msra.mxu0 %v281
    %455 = vmatmul.f32.gmra.mxu0 %v52
    %v456 = vpop.f32.mrf.mxu0
    %v457 = vadd.f32 %v437, %v456
    %458 = vdwg.mxu0
    %459 = vmatpush.msra.mxu0 %v343
    %460 = vmatpush.msra.mxu0 %v341
    %461 = vmatpush.msra.mxu0 %v339
    %462 = vmatpush.msra.mxu0 %v337
    %463 = vmatpush.msra.mxu0 %v335
    %464 = vmatpush.msra.mxu0 %v333
    %465 = vmatpush.msra.mxu0 %v331
    %466 = vmatpush.msra.mxu0 %v329
    %467 = vmatpush.msra.mxu0 %v327
    %468 = vmatpush.msra.mxu0 %v325
    %469 = vmatpush.msra.mxu0 %v323
    %470 = vmatpush.msra.mxu0 %v321
    %471 = vmatpush.msra.mxu0 %v319
    %472 = vmatpush.msra.mxu0 %v317
    %473 = vmatpush.msra.mxu0 %v315
    %474 = vmatpush.msra.mxu0 %v313
    %475 = vmatmul.f32.gmra.mxu0 %v53
    %v476 = vpop.f32.mrf.mxu0
    %v477 = vadd.f32 %v457, %v476
    %478 = vdwg.mxu0
    %479 = vmatpush.msra.mxu0 0.0
    %480 = vmatpush.msra.mxu0 0.0
    %481 = vmatpush.msra.mxu0 0.0
    %482 = vmatpush.msra.mxu0 0.0
    %483 = vmatpush.msra.mxu0 0.0
    %484 = vmatpush.msra.mxu0 0.0
    %485 = vmatpush.msra.mxu0 0.0
    %486 = vmatpush.msra.mxu0 0.0
    %487 = vmatpush.msra.mxu0 0.0
    %488 = vmatpush.msra.mxu0 0.0
    %489 = vmatpush.msra.mxu0 0.0
    %490 = vmatpush.msra.mxu0 0.0
    %491 = vmatpush.msra.mxu0 0.0
    %492 = vmatpush.msra.mxu0 0.0
    %493 = vmatpush.msra.mxu0 %v347
    %494 = vmatpush.msra.mxu0 %v345
    %495 = vmatmul.f32.gmra.mxu0 %v357
    %v496 = vpop.f32.mrf.mxu0
    %v497 = vadd.f32 %v477, %v496
    %498 = vdwg.mxu0
    %499 = vmatpush.msra.mxu0 %v184
    %500 = vmatpush.msra.mxu0 %v182
    %501 = vmatpush.msra.mxu0 %v180
    %502 = vmatpush.msra.mxu0 %v178
    %503 = vmatpush.msra.mxu0 %v176
    %504 = vmatpush.msra.mxu0 %v174
    %505 = vmatpush.msra.mxu0 %v172
    %506 = vmatpush.msra.mxu0 %v170
    %507 = vmatpush.msra.mxu0 %v168
    %508 = vmatpush.msra.mxu0 %v166
    %509 = vmatpush.msra.mxu0 %v164
    %510 = vmatpush.msra.mxu0 %v162
    %511 = vmatpush.msra.mxu0 %v160
    %512 = vmatpush.msra.mxu0 %v158
    %513 = vmatpush.msra.mxu0 %v156
    %514 = vmatpush.msra.mxu0 %v154
    %515 = vmatmul.f32.gmra.mxu0 %v48
    %v516 = vpop.f32.mrf.mxu0
    %v517 = vadd.f32 %v352, %v516
    %518 = vdwg.mxu0
    %519 = vmatpush.msra.mxu0 %v216
    %520 = vmatpush.msra.mxu0 %v214
    %521 = vmatpush.msra.mxu0 %v212
    %522 = vmatpush.msra.mxu0 %v210
    %523 = vmatpush.msra.mxu0 %v208
    %524 = vmatpush.msra.mxu0 %v206
    %525 = vmatpush.msra.mxu0 %v204
    %526 = vmatpush.msra.mxu0 %v202
    %527 = vmatpush.msra.mxu0 %v200
    %528 = vmatpush.msra.mxu0 %v198
    %529 = vmatpush.msra.mxu0 %v196
    %530 = vmatpush.msra.mxu0 %v194
    %531 = vmatpush.msra.mxu0 %v192
    %532 = vmatpush.msra.mxu0 %v190
    %533 = vmatpush.msra.mxu0 %v188
    %534 = vmatpush.msra.mxu0 %v186
    %535 = vmatmul.f32.gmra.mxu0 %v49
    %v536 = vpop.f32.mrf.mxu0
    %v537 = vadd.f32 %v517, %v536
    %538 = vdwg.mxu0
    %539 = vmatpush.msra.mxu0 %v248
    %540 = vmatpush.msra.mxu0 %v246
    %541 = vmatpush.msra.mxu0 %v244
    %542 = vmatpush.msra.mxu0 %v242
    %543 = vmatpush.msra.mxu0 %v240
    %544 = vmatpush.msra.mxu0 %v238
    %545 = vmatpush.msra.mxu0 %v236
    %546 = vmatpush.msra.mxu0 %v234
    %547 = vmatpush.msra.mxu0 %v232
    %548 = vmatpush.msra.mxu0 %v230
    %549 = vmatpush.msra.mxu0 %v228
    %550 = vmatpush.msra.mxu0 %v226
    %551 = vmatpush.msra.mxu0 %v224
    %552 = vmatpush.msra.mxu0 %v222
    %553 = vmatpush.msra.mxu0 %v220
    %554 = vmatpush.msra.mxu0 %v218
    %555 = vmatmul.f32.gmra.mxu0 %v50
    %v556 = vpop.f32.mrf.mxu0
    %v557 = vadd.f32 %v537, %v556
    %558 = vdwg.mxu0
    %559 = vmatpush.msra.mxu0 %v280
    %560 = vmatpush.msra.mxu0 %v278
    %561 = vmatpush.msra.mxu0 %v276
    %562 = vmatpush.msra.mxu0 %v274
    %563 = vmatpush.msra.mxu0 %v272
    %564 = vmatpush.msra.mxu0 %v270
    %565 = vmatpush.msra.mxu0 %v268
    %566 = vmatpush.msra.mxu0 %v266
    %567 = vmatpush.msra.mxu0 %v264
    %568 = vmatpush.msra.mxu0 %v262
    %569 = vmatpush.msra.mxu0 %v260
    %570 = vmatpush.msra.mxu0 %v258
    %571 = vmatpush.msra.mxu0 %v256
    %572 = vmatpush.msra.mxu0 %v254
    %573 = vmatpush.msra.mxu0 %v252
    %574 = vmatpush.msra.mxu0 %v250
    %575 = vmatmul.f32.gmra.mxu0 %v51
    %v576 = vpop.f32.mrf.mxu0
    %v577 = vadd.f32 %v557, %v576
    %578 = vdwg.mxu0
    %579 = vmatpush.msra.mxu0 %v312
    %580 = vmatpush.msra.mxu0 %v310
    %581 = vmatpush.msra.mxu0 %v308
    %582 = vmatpush.msra.mxu0 %v306
    %583 = vmatpush.msra.mxu0 %v304
    %584 = vmatpush.msra.mxu0 %v302
    %585 = vmatpush.msra.mxu0 %v300
    %586 = vmatpush.msra.mxu0 %v298
    %587 = vmatpush.msra.mxu0 %v296
    %588 = vmatpush.msra.mxu0 %v294
    %589 = vmatpush.msra.mxu0 %v292
    %590 = vmatpush.msra.mxu0 %v290
    %591 = vmatpush.msra.mxu0 %v288
    %592 = vmatpush.msra.mxu0 %v286
    %593 = vmatpush.msra.mxu0 %v284
    %594 = vmatpush.msra.mxu0 %v282
    %595 = vmatmul.f32.gmra.mxu0 %v52
    %v596 = vpop.f32.mrf.mxu0
    %v597 = vadd.f32 %v577, %v596
    %598 = vdwg.mxu0
    %599 = vmatpush.msra.mxu0 %v344
    %600 = vmatpush.msra.mxu0 %v342
    %601 = vmatpush.msra.mxu0 %v340
    %602 = vmatpush.msra.mxu0 %v338
    %603 = vmatpush.msra.mxu0 %v336
    %604 = vmatpush.msra.mxu0 %v334
    %605 = vmatpush.msra.mxu0 %v332
    %606 = vmatpush.msra.mxu0 %v330
    %607 = vmatpush.msra.mxu0 %v328
    %608 = vmatpush.msra.mxu0 %v326
    %609 = vmatpush.msra.mxu0 %v324
    %610 = vmatpush.msra.mxu0 %v322
    %611 = vmatpush.msra.mxu0 %v320
    %612 = vmatpush.msra.mxu0 %v318
    %613 = vmatpush.msra.mxu0 %v316
    %614 = vmatpush.msra.mxu0 %v314
    %615 = vmatmul.f32.gmra.mxu0 %v53
    %v616 = vpop.f32.mrf.mxu0
    %v617 = vadd.f32 %v597, %v616
    %618 = vdwg.mxu0
    %619 = vmatpush.msra.mxu0 0.0
    %620 = vmatpush.msra.mxu0 0.0
    %621 = vmatpush.msra.mxu0 0.0
    %622 = vmatpush.msra.mxu0 0.0
    %623 = vmatpush.msra.mxu0 0.0
    %624 = vmatpush.msra.mxu0 0.0
    %625 = vmatpush.msra.mxu0 0.0
    %626 = vmatpush.msra.mxu0 0.0
    %627 = vmatpush.msra.mxu0 0.0
    %628 = vmatpush.msra.mxu0 0.0
    %629 = vmatpush.msra.mxu0 0.0
    %630 = vmatpush.msra.mxu0 0.0
    %631 = vmatpush.msra.mxu0 0.0
    %632 = vmatpush.msra.mxu0 0.0
    %633 = vmatpush.msra.mxu0 %v348
    %634 = vmatpush.msra.mxu0 %v346
    %635 = vmatmul.f32.gmra.mxu0 %v357
    %v636 = vpop.f32.mrf.mxu0
    %v637 = vadd.f32 %v617, %v636
    %638 = vdwg.mxu0
    %v639 = vmax.f32 %v497, 0.0
    %v640 = vmax.f32 %v637, 0.0
    %v641 = vld [vmem:[%s3] sm:$0xf]
    %v642 = vld [vmem:[%s3 + $0x4] sm:$0xf]
    %v643 = vld [vmem:[%s3 + $0x8] sm:$0xf]
    %v644 = vld [vmem:[%s3 + $0xc] sm:$0xf]
    %v645 = vld [vmem:[%s3 + $0x10] sm:$0xf]
    %v646 = vld [vmem:[%s3 + $0x14] sm:$0xf]
    %v647 = vld [vmem:[%s3 + $0x18] sm:$0xf]
    %v648 = vld [vmem:[%s3 + $0x1c] sm:$0xf]
    %v649 = vld [vmem:[%s3 + $0x20] sm:$0xf]
    %v650 = vld [vmem:[%s3 + $0x24] sm:$0xf]
    %v651 = vld [vmem:[%s3 + $0x28] sm:$0xf]
    %v652 = vld [vmem:[%s3 + $0x2c] sm:$0xf]
    %v653 = vld [vmem:[%s3 + $0x30] sm:$0xf]
    %v654 = vld [vmem:[%s3 + $0x34] sm:$0xf]
    %v655 = vld [vmem:[%s3 + $0x38] sm:$0xf]
    %v656 = vld [vmem:[%s3 + $0x3c] sm:$0xf]
    %v657 = vld [vmem:[%s3 + $0x40] sm:$0xf]
    %v658 = vld [vmem:[%s3 + $0x44] sm:$0xf]
    %v659 = vld [vmem:[%s3 + $0x48] sm:$0xf]
    %v660 = vld [vmem:[%s3 + $0x4c] sm:$0xf]
    %v661 = vld [vmem:[%s3 + $0x50] sm:$0xf]
    %v662 = vld [vmem:[%s3 + $0x54] sm:$0xf]
    %v663 = vld [vmem:[%s3 + $0x58] sm:$0xf]
    %v664 = vld [vmem:[%s3 + $0x5c] sm:$0xf]
    %v665 = vld [vmem:[%s3 + $0x60] sm:$0xf]
    %v666 = vld [vmem:[%s3 + $0x64] sm:$0xf]
    %v667 = vld [vmem:[%s3 + $0x68] sm:$0xf]
    %v668 = vld [vmem:[%s3 + $0x6c] sm:$0xf]
    %v669 = vld [vmem:[%s3 + $0x70] sm:$0xf]
    %v670 = vld [vmem:[%s3 + $0x74] sm:$0xf]
    %v671 = vld [vmem:[%s3 + $0x78] sm:$0xf]
    %v672 = vld [vmem:[%s3 + $0x7c] sm:$0xf]
    %v673 = vunpack.c.l.bf16 %v641
    %v674 = vunpack.c.l.bf16 %v642
    %v675 = vunpack.c.l.bf16 %v643
    %v676 = vunpack.c.l.bf16 %v644
    %v677 = vunpack.c.l.bf16 %v645
    %v678 = vunpack.c.l.bf16 %v646
    %v679 = vunpack.c.l.bf16 %v647
    %v680 = vunpack.c.l.bf16 %v648
    %v681 = vunpack.c.l.bf16 %v649
    %v682 = vunpack.c.l.bf16 %v650
    %v683 = vunpack.c.l.bf16 %v651
    %v684 = vunpack.c.l.bf16 %v652
    %v685 = vunpack.c.l.bf16 %v653
    %v686 = vunpack.c.l.bf16 %v654
    %v687 = vunpack.c.l.bf16 %v655
    %v688 = vunpack.c.l.bf16 %v656
    %v689 = vunpack.c.l.bf16 %v657
    %v690 = vunpack.c.l.bf16 %v658
    %v691 = vunpack.c.l.bf16 %v659
    %v692 = vunpack.c.l.bf16 %v660
    %v693 = vunpack.c.l.bf16 %v661
    %v694 = vunpack.c.l.bf16 %v662
    %v695 = vunpack.c.l.bf16 %v663
    %v696 = vunpack.c.l.bf16 %v664
    %v697 = vunpack.c.l.bf16 %v665
    %v698 = vunpack.c.l.bf16 %v666
    %v699 = vunpack.c.l.bf16 %v667
    %v700 = vunpack.c.l.bf16 %v668
    %v701 = vunpack.c.l.bf16 %v669
    %v702 = vunpack.c.l.bf16 %v670
    %v703 = vunpack.c.l.bf16 %v671
    %v704 = vunpack.c.l.bf16 %v672
    %v705 = vld [vmem:[%s4] sm:$0x1]
    %v707 = vperm.slane %v705, 0
    %709 = vmatpush.msra.mxu0 %v688
    %710 = vmatpush.msra.mxu0 %v687
    %711 = vmatpush.msra.mxu0 %v686
    %712 = vmatpush.msra.mxu0 %v685
    %713 = vmatpush.msra.mxu0 %v684
    %714 = vmatpush.msra.mxu0 %v683
    %715 = vmatpush.msra.mxu0 %v682
    %716 = vmatpush.msra.mxu0 %v681
    %717 = vmatpush.msra.mxu0 %v680
    %718 = vmatpush.msra.mxu0 %v679
    %719 = vmatpush.msra.mxu0 %v678
    %720 = vmatpush.msra.mxu0 %v677
    %721 = vmatpush.msra.mxu0 %v676
    %722 = vmatpush.msra.mxu0 %v675
    %723 = vmatpush.msra.mxu0 %v674
    %724 = vmatpush.msra.mxu0 %v673
    %725 = vmatmul.f32.gmra.mxu0 %v639
    %v726 = vpop.f32.mrf.mxu0
    %v727 = vadd.f32 %v707, %v726
    %728 = vdwg.mxu0
    %729 = vmatpush.msra.mxu0 %v704
    %730 = vmatpush.msra.mxu0 %v703
    %731 = vmatpush.msra.mxu0 %v702
    %732 = vmatpush.msra.mxu0 %v701
    %733 = vmatpush.msra.mxu0 %v700
    %734 = vmatpush.msra.mxu0 %v699
    %735 = vmatpush.msra.mxu0 %v698
    %736 = vmatpush.msra.mxu0 %v697
    %737 = vmatpush.msra.mxu0 %v696
    %738 = vmatpush.msra.mxu0 %v695
    %739 = vmatpush.msra.mxu0 %v694
    %740 = vmatpush.msra.mxu0 %v693
    %741 = vmatpush.msra.mxu0 %v692
    %742 = vmatpush.msra.mxu0 %v691
    %743 = vmatpush.msra.mxu0 %v690
    %744 = vmatpush.msra.mxu0 %v689
    %745 = vmatmul.f32.gmra.mxu0 %v640
    %v746 = vpop.f32.mrf.mxu0
    %v747 = vadd.f32 %v727, %v746
    %748 = vdwg.mxu0
    %v749 = vmax.f32 %v747, 0.0
    %v750 = vld [vmem:[%s5] sm:$0xf]
    %v751 = vld [vmem:[%s5 + $0x4] sm:$0xf]
    %v752 = vld [vmem:[%s5 + $0x8] sm:$0xf]
    %v753 = vld [vmem:[%s5 + $0xc] sm:$0xf]
    %v754 = vld [vmem:[%s5 + $0x10] sm:$0xf]
    %v755 = vld [vmem:[%s5 + $0x14] sm:$0xf]
    %v756 = vld [vmem:[%s5 + $0x18] sm:$0xf]
    %v757 = vld [vmem:[%s5 + $0x1c] sm:$0xf]
    %v758 = vld [vmem:[%s5 + $0x20] sm:$0xf]
    %v759 = vld [vmem:[%s5 + $0x24] sm:$0xf]
    %v760 = vld [vmem:[%s5 + $0x28] sm:$0xf]
    %v761 = vld [vmem:[%s5 + $0x2c] sm:$0xf]
    %v762 = vld [vmem:[%s5 + $0x30] sm:$0xf]
    %v763 = vld [vmem:[%s5 + $0x34] sm:$0xf]
    %v764 = vld [vmem:[%s5 + $0x38] sm:$0xf]
    %v765 = vld [vmem:[%s5 + $0x3c] sm:$0xf]
    %v766 = vunpack.c.l.bf16 %v750
    %v767 = vunpack.c.l.bf16 %v751
    %v768 = vunpack.c.l.bf16 %v752
    %v769 = vunpack.c.l.bf16 %v753
    %v770 = vunpack.c.l.bf16 %v754
    %v771 = vunpack.c.l.bf16 %v755
    %v772 = vunpack.c.l.bf16 %v756
    %v773 = vunpack.c.l.bf16 %v757
    %v774 = vunpack.c.l.bf16 %v758
    %v775 = vunpack.c.l.bf16 %v759
    %v776 = vunpack.c.l.bf16 %v760
    %v777 = vunpack.c.l.bf16 %v761
    %v778 = vunpack.c.l.bf16 %v762
    %v779 = vunpack.c.l.bf16 %v763
    %v780 = vunpack.c.l.bf16 %v764
    %v781 = vunpack.c.l.bf16 %v765
    %v782 = vld [vmem:[%s6] sm:$0x1]
    %v784 = vperm.slane %v782, 0
    %786 = vmatpush.msra.mxu0 %v781
    %787 = vmatpush.msra.mxu0 %v780
    %788 = vmatpush.msra.mxu0 %v779
    %789 = vmatpush.msra.mxu0 %v778
    %790 = vmatpush.msra.mxu0 %v777
    %791 = vmatpush.msra.mxu0 %v776
    %792 = vmatpush.msra.mxu0 %v775
    %793 = vmatpush.msra.mxu0 %v774
    %794 = vmatpush.msra.mxu0 %v773
    %795 = vmatpush.msra.mxu0 %v772
    %796 = vmatpush.msra.mxu0 %v771
    %797 = vmatpush.msra.mxu0 %v770
    %798 = vmatpush.msra.mxu0 %v769
    %799 = vmatpush.msra.mxu0 %v768
    %800 = vmatpush.msra.mxu0 %v767
    %801 = vmatpush.msra.mxu0 %v766
    %802 = vmatmul.f32.gmra.mxu0 %v749
    %v803 = vpop.f32.mrf.mxu0
    %v804 = vadd.f32 %v784, %v803
    %805 = vdwg.mxu0
    %v806 = vmax.f32 %v804, 0.0
    %v807 = vld [vmem:[%s7] sm:$0xf]
    %v808 = vld [vmem:[%s7 + $0x4] sm:$0xf]
    %v809 = vld [vmem:[%s7 + $0x8] sm:$0xf]
    %v810 = vld [vmem:[%s7 + $0xc] sm:$0xf]
    %v811 = vld [vmem:[%s7 + $0x10] sm:$0xf]
    %v812 = vld [vmem:[%s7 + $0x14] sm:$0xf]
    %v813 = vld [vmem:[%s7 + $0x18] sm:$0xf]
    %v814 = vld [vmem:[%s7 + $0x1c] sm:$0xf]
    %v815 = vld [vmem:[%s7 + $0x20] sm:$0xf]
    %v816 = vld [vmem:[%s7 + $0x24] sm:$0xf]
    %v817 = vld [vmem:[%s7 + $0x28] sm:$0xf]
    %v818 = vld [vmem:[%s7 + $0x2c] sm:$0xf]
    %v819 = vld [vmem:[%s7 + $0x30] sm:$0xf]
    %v820 = vld [vmem:[%s7 + $0x34] sm:$0xf]
    %v821 = vld [vmem:[%s7 + $0x38] sm:$0xf]
    %v822 = vld [vmem:[%s7 + $0x3c] sm:$0xf]
    %v823 = vunpack.c.l.bf16 %v807
    %v824 = vunpack.c.l.bf16 %v808
    %v825 = vunpack.c.l.bf16 %v809
    %v826 = vunpack.c.l.bf16 %v810
    %v827 = vunpack.c.l.bf16 %v811
    %v828 = vunpack.c.l.bf16 %v812
    %v829 = vunpack.c.l.bf16 %v813
    %v830 = vunpack.c.l.bf16 %v814
    %v831 = vunpack.c.l.bf16 %v815
    %v832 = vunpack.c.l.bf16 %v816
    %v833 = vunpack.c.l.bf16 %v817
    %v834 = vunpack.c.l.bf16 %v818
    %v835 = vunpack.c.l.bf16 %v819
    %v836 = vunpack.c.l.bf16 %v820
    %v837 = vunpack.c.l.bf16 %v821
    %v838 = vunpack.c.l.bf16 %v822
    %v839 = vld [vmem:[%s8] sm:$0x1]
    %v841 = vperm.slane %v839, 0
    %843 = vmatpush.msra.mxu0 %v838
    %844 = vmatpush.msra.mxu0 %v837
    %845 = vmatpush.msra.mxu0 %v836
    %846 = vmatpush.msra.mxu0 %v835
    %847 = vmatpush.msra.mxu0 %v834
    %848 = vmatpush.msra.mxu0 %v833
    %849 = vmatpush.msra.mxu0 %v832
    %850 = vmatpush.msra.mxu0 %v831
    %851 = vmatpush.msra.mxu0 %v830
    %852 = vmatpush.msra.mxu0 %v829
    %853 = vmatpush.msra.mxu0 %v828
    %854 = vmatpush.msra.mxu0 %v827
    %855 = vmatpush.msra.mxu0 %v826
    %856 = vmatpush.msra.mxu0 %v825
    %857 = vmatpush.msra.mxu0 %v824
    %858 = vmatpush.msra.mxu0 %v823
    %859 = vmatmul.f32.gmra.mxu0 %v806
    %v860 = vpop.f32.mrf.mxu0
    %v861 = vadd.f32 %v841, %v860
    %862 = vdwg.mxu0
    %v863 = vmax.f32 %v861, 0.0
    %v864 = vld [vmem:[%s9] sm:$0xff]
    %v865 = vld [vmem:[%s9 + $0x8] sm:$0xff]
    %v866 = vld [vmem:[%s9 + $0x10] sm:$0xff]
    %v867 = vld [vmem:[%s9 + $0x18] sm:$0xff]
    %v868 = vld [vmem:[%s9 + $0x20] sm:$0xff]
    %v869 = vld [vmem:[%s9 + $0x28] sm:$0xff]
    %v870 = vld [vmem:[%s9 + $0x30] sm:$0xff]
    %v871 = vld [vmem:[%s9 + $0x38] sm:$0xff]
    %v872 = vld [vmem:[%s9 + $0x40] sm:$0xff]
    %v873 = vld [vmem:[%s9 + $0x48] sm:$0xff]
    %v874 = vld [vmem:[%s9 + $0x50] sm:$0xff]
    %v875 = vld [vmem:[%s9 + $0x58] sm:$0xff]
    %v876 = vld [vmem:[%s9 + $0x60] sm:$0xff]
    %v877 = vld [vmem:[%s9 + $0x68] sm:$0xff]
    %v878 = vld [vmem:[%s9 + $0x70] sm:$0xff]
    %v879 = vld [vmem:[%s9 + $0x78] sm:$0xff]
    %v880 = vunpack.c.l.bf16 %v864
    %v881 = vunpack.c.h.bf16 %v864
    %v882 = vunpack.c.l.bf16 %v865
    %v883 = vunpack.c.h.bf16 %v865
    %v884 = vunpack.c.l.bf16 %v866
    %v885 = vunpack.c.h.bf16 %v866
    %v886 = vunpack.c.l.bf16 %v867
    %v887 = vunpack.c.h.bf16 %v867
    %v888 = vunpack.c.l.bf16 %v868
    %v889 = vunpack.c.h.bf16 %v868
    %v890 = vunpack.c.l.bf16 %v869
    %v891 = vunpack.c.h.bf16 %v869
    %v892 = vunpack.c.l.bf16 %v870
    %v893 = vunpack.c.h.bf16 %v870
    %v894 = vunpack.c.l.bf16 %v871
    %v895 = vunpack.c.h.bf16 %v871
    %v896 = vunpack.c.l.bf16 %v872
    %v897 = vunpack.c.h.bf16 %v872
    %v898 = vunpack.c.l.bf16 %v873
    %v899 = vunpack.c.h.bf16 %v873
    %v900 = vunpack.c.l.bf16 %v874
    %v901 = vunpack.c.h.bf16 %v874
    %v902 = vunpack.c.l.bf16 %v875
    %v903 = vunpack.c.h.bf16 %v875
    %v904 = vunpack.c.l.bf16 %v876
    %v905 = vunpack.c.h.bf16 %v876
    %v906 = vunpack.c.l.bf16 %v877
    %v907 = vunpack.c.h.bf16 %v877
    %v908 = vunpack.c.l.bf16 %v878
    %v909 = vunpack.c.h.bf16 %v878
    %v910 = vunpack.c.l.bf16 %v879
    %v911 = vunpack.c.h.bf16 %v879
    %v912 = vld [vmem:[%s10] sm:$0x3]
    %v914 = vperm.slane %v912, 0
    %v915 = vperm.slane %v912, 1
    %918 = vmatpush.msra.mxu0 %v910
    %919 = vmatpush.msra.mxu0 %v908
    %920 = vmatpush.msra.mxu0 %v906
    %921 = vmatpush.msra.mxu0 %v904
    %922 = vmatpush.msra.mxu0 %v902
    %923 = vmatpush.msra.mxu0 %v900
    %924 = vmatpush.msra.mxu0 %v898
    %925 = vmatpush.msra.mxu0 %v896
    %926 = vmatpush.msra.mxu0 %v894
    %927 = vmatpush.msra.mxu0 %v892
    %928 = vmatpush.msra.mxu0 %v890
    %929 = vmatpush.msra.mxu0 %v888
    %930 = vmatpush.msra.mxu0 %v886
    %931 = vmatpush.msra.mxu0 %v884
    %932 = vmatpush.msra.mxu0 %v882
    %933 = vmatpush.msra.mxu0 %v880
    %934 = vmatmul.f32.gmra.mxu0 %v863
    %v935 = vpop.f32.mrf.mxu0
    %v936 = vadd.f32 %v914, %v935
    %937 = vdwg.mxu0
    %938 = vmatpush.msra.mxu0 %v911
    %939 = vmatpush.msra.mxu0 %v909
    %940 = vmatpush.msra.mxu0 %v907
    %941 = vmatpush.msra.mxu0 %v905
    %942 = vmatpush.msra.mxu0 %v903
    %943 = vmatpush.msra.mxu0 %v901
    %944 = vmatpush.msra.mxu0 %v899
    %945 = vmatpush.msra.mxu0 %v897
    %946 = vmatpush.msra.mxu0 %v895
    %947 = vmatpush.msra.mxu0 %v893
    %948 = vmatpush.msra.mxu0 %v891
    %949 = vmatpush.msra.mxu0 %v889
    %950 = vmatpush.msra.mxu0 %v887
    %951 = vmatpush.msra.mxu0 %v885
    %952 = vmatpush.msra.mxu0 %v883
    %953 = vmatpush.msra.mxu0 %v881
    %954 = vmatmul.f32.gmra.mxu0 %v863
    %v955 = vpop.f32.mrf.mxu0
    %v956 = vadd.f32 %v915, %v955
    %957 = vdwg.mxu0
    %v958 = vmax.f32 %v936, 0.0
    %v959 = vmax.f32 %v956, 0.0
    %v960 = vld [vmem:[%s11] sm:$0xff]
    %v961 = vld [vmem:[%s11 + $0x8] sm:$0xff]
    %v962 = vld [vmem:[%s11 + $0x10] sm:$0xff]
    %v963 = vld [vmem:[%s11 + $0x18] sm:$0xf]
    %v964 = vld [vmem:[%s11 + $0x1c] sm:$0xff]
    %v965 = vld [vmem:[%s11 + $0x24] sm:$0xff]
    %v966 = vld [vmem:[%s11 + $0x2c] sm:$0xff]
    %v967 = vld [vmem:[%s11 + $0x34] sm:$0xf]
    %v968 = vld [vmem:[%s11 + $0x38] sm:$0xff]
    %v969 = vld [vmem:[%s11 + $0x40] sm:$0xff]
    %v970 = vld [vmem:[%s11 + $0x48] sm:$0xff]
    %v971 = vld [vmem:[%s11 + $0x50] sm:$0xf]
    %v972 = vld [vmem:[%s11 + $0x54] sm:$0xff]
    %v973 = vld [vmem:[%s11 + $0x5c] sm:$0xff]
    %v974 = vld [vmem:[%s11 + $0x64] sm:$0xff]
    %v975 = vld [vmem:[%s11 + $0x6c] sm:$0xf]
    %v976 = vld [vmem:[%s11 + $0x70] sm:$0xff]
    %v977 = vld [vmem:[%s11 + $0x78] sm:$0xff]
    %v978 = vld [vmem:[%s11 + $0x80] sm:$0xff]
    %v979 = vld [vmem:[%s11 + $0x88] sm:$0xf]
    %v980 = vld [vmem:[%s11 + $0x8c] sm:$0xff]
    %v981 = vld [vmem:[%s11 + $0x94] sm:$0xff]
    %v982 = vld [vmem:[%s11 + $0x9c] sm:$0xff]
    %v983 = vld [vmem:[%s11 + $0xa4] sm:$0xf]
    %v984 = vld [vmem:[%s11 + $0xa8] sm:$0xff]
    %v985 = vld [vmem:[%s11 + $0xb0] sm:$0xff]
    %v986 = vld [vmem:[%s11 + $0xb8] sm:$0xff]
    %v987 = vld [vmem:[%s11 + $0xc0] sm:$0xf]
    %v988 = vld [vmem:[%s11 + $0xc4] sm:$0xff]
    %v989 = vld [vmem:[%s11 + $0xcc] sm:$0xff]
    %v990 = vld [vmem:[%s11 + $0xd4] sm:$0xff]
    %v991 = vld [vmem:[%s11 + $0xdc] sm:$0xf]
    %v992 = vld [vmem:[%s11 + $0xe0] sm:$0xff]
    %v993 = vld [vmem:[%s11 + $0xe8] sm:$0xff]
    %v994 = vld [vmem:[%s11 + $0xf0] sm:$0xff]
    %v995 = vld [vmem:[%s11 + $0xf8] sm:$0xf]
    %v996 = vld [vmem:[%s11 + $0xfc] sm:$0xff]
    %v997 = vld [vmem:[%s11 + $0x104] sm:$0xff]
    %v998 = vld [vmem:[%s11 + $0x10c] sm:$0xff]
    %v999 = vld [vmem:[%s11 + $0x114] sm:$0xf]
    %v1000 = vld [vmem:[%s11 + $0x118] sm:$0xff]
    %v1001 = vld [vmem:[%s11 + $0x120] sm:$0xff]
    %v1002 = vld [vmem:[%s11 + $0x128] sm:$0xff]
    %v1003 = vld [vmem:[%s11 + $0x130] sm:$0xf]
    %v1004 = vld [vmem:[%s11 + $0x134] sm:$0xff]
    %v1005 = vld [vmem:[%s11 + $0x13c] sm:$0xff]
    %v1006 = vld [vmem:[%s11 + $0x144] sm:$0xff]
    %v1007 = vld [vmem:[%s11 + $0x14c] sm:$0xf]
    %v1008 = vld [vmem:[%s11 + $0x150] sm:$0xff]
    %v1009 = vld [vmem:[%s11 + $0x158] sm:$0xff]
    %v1010 = vld [vmem:[%s11 + $0x160] sm:$0xff]
    %v1011 = vld [vmem:[%s11 + $0x168] sm:$0xf]
    %v1012 = vld [vmem:[%s11 + $0x16c] sm:$0xff]
    %v1013 = vld [vmem:[%s11 + $0x174] sm:$0xff]
    %v1014 = vld [vmem:[%s11 + $0x17c] sm:$0xff]
    %v1015 = vld [vmem:[%s11 + $0x184] sm:$0xf]
    %v1016 = vld [vmem:[%s11 + $0x188] sm:$0xff]
    %v1017 = vld [vmem:[%s11 + $0x190] sm:$0xff]
    %v1018 = vld [vmem:[%s11 + $0x198] sm:$0xff]
    %v1019 = vld [vmem:[%s11 + $0x1a0] sm:$0xf]
    %v1020 = vld [vmem:[%s11 + $0x1a4] sm:$0xff]
    %v1021 = vld [vmem:[%s11 + $0x1ac] sm:$0xff]
    %v1022 = vld [vmem:[%s11 + $0x1b4] sm:$0xff]
    %v1023 = vld [vmem:[%s11 + $0x1bc] sm:$0xf]
    %v1024 = vld [vmem:[%s11 + $0x1c0] sm:$0xff]
    %v1025 = vld [vmem:[%s11 + $0x1c8] sm:$0xff]
    %v1026 = vld [vmem:[%s11 + $0x1d0] sm:$0xff]
    %v1027 = vld [vmem:[%s11 + $0x1d8] sm:$0xf]
    %v1028 = vld [vmem:[%s11 + $0x1dc] sm:$0xff]
    %v1029 = vld [vmem:[%s11 + $0x1e4] sm:$0xff]
    %v1030 = vld [vmem:[%s11 + $0x1ec] sm:$0xff]
    %v1031 = vld [vmem:[%s11 + $0x1f4] sm:$0xf]
    %v1032 = vld [vmem:[%s11 + $0x1f8] sm:$0xff]
    %v1033 = vld [vmem:[%s11 + $0x200] sm:$0xff]
    %v1034 = vld [vmem:[%s11 + $0x208] sm:$0xff]
    %v1035 = vld [vmem:[%s11 + $0x210] sm:$0xf]
    %v1036 = vld [vmem:[%s11 + $0x214] sm:$0xff]
    %v1037 = vld [vmem:[%s11 + $0x21c] sm:$0xff]
    %v1038 = vld [vmem:[%s11 + $0x224] sm:$0xff]
    %v1039 = vld [vmem:[%s11 + $0x22c] sm:$0xf]
    %v1040 = vld [vmem:[%s11 + $0x230] sm:$0xff]
    %v1041 = vld [vmem:[%s11 + $0x238] sm:$0xff]
    %v1042 = vld [vmem:[%s11 + $0x240] sm:$0xff]
    %v1043 = vld [vmem:[%s11 + $0x248] sm:$0xf]
    %v1044 = vld [vmem:[%s11 + $0x24c] sm:$0xff]
    %v1045 = vld [vmem:[%s11 + $0x254] sm:$0xff]
    %v1046 = vld [vmem:[%s11 + $0x25c] sm:$0xff]
    %v1047 = vld [vmem:[%s11 + $0x264] sm:$0xf]
    %v1048 = vld [vmem:[%s11 + $0x268] sm:$0xff]
    %v1049 = vld [vmem:[%s11 + $0x270] sm:$0xff]
    %v1050 = vld [vmem:[%s11 + $0x278] sm:$0xff]
    %v1051 = vld [vmem:[%s11 + $0x280] sm:$0xf]
    %v1052 = vld [vmem:[%s11 + $0x284] sm:$0xff]
    %v1053 = vld [vmem:[%s11 + $0x28c] sm:$0xff]
    %v1054 = vld [vmem:[%s11 + $0x294] sm:$0xff]
    %v1055 = vld [vmem:[%s11 + $0x29c] sm:$0xf]
    %v1056 = vld [vmem:[%s11 + $0x2a0] sm:$0xff]
    %v1057 = vld [vmem:[%s11 + $0x2a8] sm:$0xff]
    %v1058 = vld [vmem:[%s11 + $0x2b0] sm:$0xff]
    %v1059 = vld [vmem:[%s11 + $0x2b8] sm:$0xf]
    %v1060 = vld [vmem:[%s11 + $0x2bc] sm:$0xff]
    %v1061 = vld [vmem:[%s11 + $0x2c4] sm:$0xff]
    %v1062 = vld [vmem:[%s11 + $0x2cc] sm:$0xff]
    %v1063 = vld [vmem:[%s11 + $0x2d4] sm:$0xf]
    %v1064 = vld [vmem:[%s11 + $0x2d8] sm:$0xff]
    %v1065 = vld [vmem:[%s11 + $0x2e0] sm:$0xff]
    %v1066 = vld [vmem:[%s11 + $0x2e8] sm:$0xff]
    %v1067 = vld [vmem:[%s11 + $0x2f0] sm:$0xf]
    %v1068 = vld [vmem:[%s11 + $0x2f4] sm:$0xff]
    %v1069 = vld [vmem:[%s11 + $0x2fc] sm:$0xff]
    %v1070 = vld [vmem:[%s11 + $0x304] sm:$0xff]
    %v1071 = vld [vmem:[%s11 + $0x30c] sm:$0xf]
    %v1072 = vld [vmem:[%s11 + $0x310] sm:$0xff]
    %v1073 = vld [vmem:[%s11 + $0x318] sm:$0xff]
    %v1074 = vld [vmem:[%s11 + $0x320] sm:$0xff]
    %v1075 = vld [vmem:[%s11 + $0x328] sm:$0xf]
    %v1076 = vld [vmem:[%s11 + $0x32c] sm:$0xff]
    %v1077 = vld [vmem:[%s11 + $0x334] sm:$0xff]
    %v1078 = vld [vmem:[%s11 + $0x33c] sm:$0xff]
    %v1079 = vld [vmem:[%s11 + $0x344] sm:$0xf]
    %v1080 = vld [vmem:[%s11 + $0x348] sm:$0xff]
    %v1081 = vld [vmem:[%s11 + $0x350] sm:$0xff]
    %v1082 = vld [vmem:[%s11 + $0x358] sm:$0xff]
    %v1083 = vld [vmem:[%s11 + $0x360] sm:$0xf]
    %v1084 = vld [vmem:[%s11 + $0x364] sm:$0xff]
    %v1085 = vld [vmem:[%s11 + $0x36c] sm:$0xff]
    %v1086 = vld [vmem:[%s11 + $0x374] sm:$0xff]
    %v1087 = vld [vmem:[%s11 + $0x37c] sm:$0xf]
    %v1088 = vunpack.c.l.bf16 %v960
    %v1089 = vunpack.c.h.bf16 %v960
    %v1090 = vunpack.c.l.bf16 %v961
    %v1091 = vunpack.c.h.bf16 %v961
    %v1092 = vunpack.c.l.bf16 %v962
    %v1093 = vunpack.c.h.bf16 %v962
    %v1094 = vunpack.c.l.bf16 %v963
    %v1095 = vunpack.c.l.bf16 %v964
    %v1096 = vunpack.c.h.bf16 %v964
    %v1097 = vunpack.c.l.bf16 %v965
    %v1098 = vunpack.c.h.bf16 %v965
    %v1099 = vunpack.c.l.bf16 %v966
    %v1100 = vunpack.c.h.bf16 %v966
    %v1101 = vunpack.c.l.bf16 %v967
    %v1102 = vunpack.c.l.bf16 %v968
    %v1103 = vunpack.c.h.bf16 %v968
    %v1104 = vunpack.c.l.bf16 %v969
    %v1105 = vunpack.c.h.bf16 %v969
    %v1106 = vunpack.c.l.bf16 %v970
    %v1107 = vunpack.c.h.bf16 %v970
    %v1108 = vunpack.c.l.bf16 %v971
    %v1109 = vunpack.c.l.bf16 %v972
    %v1110 = vunpack.c.h.bf16 %v972
    %v1111 = vunpack.c.l.bf16 %v973
    %v1112 = vunpack.c.h.bf16 %v973
    %v1113 = vunpack.c.l.bf16 %v974
    %v1114 = vunpack.c.h.bf16 %v974
    %v1115 = vunpack.c.l.bf16 %v975
    %v1116 = vunpack.c.l.bf16 %v976
    %v1117 = vunpack.c.h.bf16 %v976
    %v1118 = vunpack.c.l.bf16 %v977
    %v1119 = vunpack.c.h.bf16 %v977
    %v1120 = vunpack.c.l.bf16 %v978
    %v1121 = vunpack.c.h.bf16 %v978
    %v1122 = vunpack.c.l.bf16 %v979
    %v1123 = vunpack.c.l.bf16 %v980
    %v1124 = vunpack.c.h.bf16 %v980
    %v1125 = vunpack.c.l.bf16 %v981
    %v1126 = vunpack.c.h.bf16 %v981
    %v1127 = vunpack.c.l.bf16 %v982
    %v1128 = vunpack.c.h.bf16 %v982
    %v1129 = vunpack.c.l.bf16 %v983
    %v1130 = vunpack.c.l.bf16 %v984
    %v1131 = vunpack.c.h.bf16 %v984
    %v1132 = vunpack.c.l.bf16 %v985
    %v1133 = vunpack.c.h.bf16 %v985
    %v1134 = vunpack.c.l.bf16 %v986
    %v1135 = vunpack.c.h.bf16 %v986
    %v1136 = vunpack.c.l.bf16 %v987
    %v1137 = vunpack.c.l.bf16 %v988
    %v1138 = vunpack.c.h.bf16 %v988
    %v1139 = vunpack.c.l.bf16 %v989
    %v1140 = vunpack.c.h.bf16 %v989
    %v1141 = vunpack.c.l.bf16 %v990
    %v1142 = vunpack.c.h.bf16 %v990
    %v1143 = vunpack.c.l.bf16 %v991
    %v1144 = vunpack.c.l.bf16 %v992
    %v1145 = vunpack.c.h.bf16 %v992
    %v1146 = vunpack.c.l.bf16 %v993
    %v1147 = vunpack.c.h.bf16 %v993
    %v1148 = vunpack.c.l.bf16 %v994
    %v1149 = vunpack.c.h.bf16 %v994
    %v1150 = vunpack.c.l.bf16 %v995
    %v1151 = vunpack.c.l.bf16 %v996
    %v1152 = vunpack.c.h.bf16 %v996
    %v1153 = vunpack.c.l.bf16 %v997
    %v1154 = vunpack.c.h.bf16 %v997
    %v1155 = vunpack.c.l.bf16 %v998
    %v1156 = vunpack.c.h.bf16 %v998
    %v1157 = vunpack.c.l.bf16 %v999
    %v1158 = vunpack.c.l.bf16 %v1000
    %v1159 = vunpack.c.h.bf16 %v1000
    %v1160 = vunpack.c.l.bf16 %v1001
    %v1161 = vunpack.c.h.bf16 %v1001
    %v1162 = vunpack.c.l.bf16 %v1002
    %v1163 = vunpack.c.h.bf16 %v1002
    %v1164 = vunpack.c.l.bf16 %v1003
    %v1165 = vunpack.c.l.bf16 %v1004
    %v1166 = vunpack.c.h.bf16 %v1004
    %v1167 = vunpack.c.l.bf16 %v1005
    %v1168 = vunpack.c.h.bf16 %v1005
    %v1169 = vunpack.c.l.bf16 %v1006
    %v1170 = vunpack.c.h.bf16 %v1006
    %v1171 = vunpack.c.l.bf16 %v1007
    %v1172 = vunpack.c.l.bf16 %v1008
    %v1173 = vunpack.c.h.bf16 %v1008
    %v1174 = vunpack.c.l.bf16 %v1009
    %v1175 = vunpack.c.h.bf16 %v1009
    %v1176 = vunpack.c.l.bf16 %v1010
    %v1177 = vunpack.c.h.bf16 %v1010
    %v1178 = vunpack.c.l.bf16 %v1011
    %v1179 = vunpack.c.l.bf16 %v1012
    %v1180 = vunpack.c.h.bf16 %v1012
    %v1181 = vunpack.c.l.bf16 %v1013
    %v1182 = vunpack.c.h.bf16 %v1013
    %v1183 = vunpack.c.l.bf16 %v1014
    %v1184 = vunpack.c.h.bf16 %v1014
    %v1185 = vunpack.c.l.bf16 %v1015
    %v1186 = vunpack.c.l.bf16 %v1016
    %v1187 = vunpack.c.h.bf16 %v1016
    %v1188 = vunpack.c.l.bf16 %v1017
    %v1189 = vunpack.c.h.bf16 %v1017
    %v1190 = vunpack.c.l.bf16 %v1018
    %v1191 = vunpack.c.h.bf16 %v1018
    %v1192 = vunpack.c.l.bf16 %v1019
    %v1193 = vunpack.c.l.bf16 %v1020
    %v1194 = vunpack.c.h.bf16 %v1020
    %v1195 = vunpack.c.l.bf16 %v1021
    %v1196 = vunpack.c.h.bf16 %v1021
    %v1197 = vunpack.c.l.bf16 %v1022
    %v1198 = vunpack.c.h.bf16 %v1022
    %v1199 = vunpack.c.l.bf16 %v1023
    %v1200 = vunpack.c.l.bf16 %v1024
    %v1201 = vunpack.c.h.bf16 %v1024
    %v1202 = vunpack.c.l.bf16 %v1025
    %v1203 = vunpack.c.h.bf16 %v1025
    %v1204 = vunpack.c.l.bf16 %v1026
    %v1205 = vunpack.c.h.bf16 %v1026
    %v1206 = vunpack.c.l.bf16 %v1027
    %v1207 = vunpack.c.l.bf16 %v1028
    %v1208 = vunpack.c.h.bf16 %v1028
    %v1209 = vunpack.c.l.bf16 %v1029
    %v1210 = vunpack.c.h.bf16 %v1029
    %v1211 = vunpack.c.l.bf16 %v1030
    %v1212 = vunpack.c.h.bf16 %v1030
    %v1213 = vunpack.c.l.bf16 %v1031
    %v1214 = vunpack.c.l.bf16 %v1032
    %v1215 = vunpack.c.h.bf16 %v1032
    %v1216 = vunpack.c.l.bf16 %v1033
    %v1217 = vunpack.c.h.bf16 %v1033
    %v1218 = vunpack.c.l.bf16 %v1034
    %v1219 = vunpack.c.h.bf16 %v1034
    %v1220 = vunpack.c.l.bf16 %v1035
    %v1221 = vunpack.c.l.bf16 %v1036
    %v1222 = vunpack.c.h.bf16 %v1036
    %v1223 = vunpack.c.l.bf16 %v1037
    %v1224 = vunpack.c.h.bf16 %v1037
    %v1225 = vunpack.c.l.bf16 %v1038
    %v1226 = vunpack.c.h.bf16 %v1038
    %v1227 = vunpack.c.l.bf16 %v1039
    %v1228 = vunpack.c.l.bf16 %v1040
    %v1229 = vunpack.c.h.bf16 %v1040
    %v1230 = vunpack.c.l.bf16 %v1041
    %v1231 = vunpack.c.h.bf16 %v1041
    %v1232 = vunpack.c.l.bf16 %v1042
    %v1233 = vunpack.c.h.bf16 %v1042
    %v1234 = vunpack.c.l.bf16 %v1043
    %v1235 = vunpack.c.l.bf16 %v1044
    %v1236 = vunpack.c.h.bf16 %v1044
    %v1237 = vunpack.c.l.bf16 %v1045
    %v1238 = vunpack.c.h.bf16 %v1045
    %v1239 = vunpack.c.l.bf16 %v1046
    %v1240 = vunpack.c.h.bf16 %v1046
    %v1241 = vunpack.c.l.bf16 %v1047
    %v1242 = vunpack.c.l.bf16 %v1048
    %v1243 = vunpack.c.h.bf16 %v1048
    %v1244 = vunpack.c.l.bf16 %v1049
    %v1245 = vunpack.c.h.bf16 %v1049
    %v1246 = vunpack.c.l.bf16 %v1050
    %v1247 = vunpack.c.h.bf16 %v1050
    %v1248 = vunpack.c.l.bf16 %v1051
    %v1249 = vunpack.c.l.bf16 %v1052
    %v1250 = vunpack.c.h.bf16 %v1052
    %v1251 = vunpack.c.l.bf16 %v1053
    %v1252 = vunpack.c.h.bf16 %v1053
    %v1253 = vunpack.c.l.bf16 %v1054
    %v1254 = vunpack.c.h.bf16 %v1054
    %v1255 = vunpack.c.l.bf16 %v1055
    %v1256 = vunpack.c.l.bf16 %v1056
    %v1257 = vunpack.c.h.bf16 %v1056
    %v1258 = vunpack.c.l.bf16 %v1057
    %v1259 = vunpack.c.h.bf16 %v1057
    %v1260 = vunpack.c.l.bf16 %v1058
    %v1261 = vunpack.c.h.bf16 %v1058
    %v1262 = vunpack.c.l.bf16 %v1059
    %v1263 = vunpack.c.l.bf16 %v1060
    %v1264 = vunpack.c.h.bf16 %v1060
    %v1265 = vunpack.c.l.bf16 %v1061
    %v1266 = vunpack.c.h.bf16 %v1061
    %v1267 = vunpack.c.l.bf16 %v1062
    %v1268 = vunpack.c.h.bf16 %v1062
    %v1269 = vunpack.c.l.bf16 %v1063
    %v1270 = vunpack.c.l.bf16 %v1064
    %v1271 = vunpack.c.h.bf16 %v1064
    %v1272 = vunpack.c.l.bf16 %v1065
    %v1273 = vunpack.c.h.bf16 %v1065
    %v1274 = vunpack.c.l.bf16 %v1066
    %v1275 = vunpack.c.h.bf16 %v1066
    %v1276 = vunpack.c.l.bf16 %v1067
    %v1277 = vunpack.c.l.bf16 %v1068
    %v1278 = vunpack.c.h.bf16 %v1068
    %v1279 = vunpack.c.l.bf16 %v1069
    %v1280 = vunpack.c.h.bf16 %v1069
    %v1281 = vunpack.c.l.bf16 %v1070
    %v1282 = vunpack.c.h.bf16 %v1070
    %v1283 = vunpack.c.l.bf16 %v1071
    %v1284 = vunpack.c.l.bf16 %v1072
    %v1285 = vunpack.c.h.bf16 %v1072
    %v1286 = vunpack.c.l.bf16 %v1073
    %v1287 = vunpack.c.h.bf16 %v1073
    %v1288 = vunpack.c.l.bf16 %v1074
    %v1289 = vunpack.c.h.bf16 %v1074
    %v1290 = vunpack.c.l.bf16 %v1075
    %v1291 = vunpack.c.l.bf16 %v1076
    %v1292 = vunpack.c.h.bf16 %v1076
    %v1293 = vunpack.c.l.bf16 %v1077
    %v1294 = vunpack.c.h.bf16 %v1077
    %v1295 = vunpack.c.l.bf16 %v1078
    %v1296 = vunpack.c.h.bf16 %v1078
    %v1297 = vunpack.c.l.bf16 %v1079
    %v1298 = vunpack.c.l.bf16 %v1080
    %v1299 = vunpack.c.h.bf16 %v1080
    %v1300 = vunpack.c.l.bf16 %v1081
    %v1301 = vunpack.c.h.bf16 %v1081
    %v1302 = vunpack.c.l.bf16 %v1082
    %v1303 = vunpack.c.h.bf16 %v1082
    %v1304 = vunpack.c.l.bf16 %v1083
    %v1305 = vunpack.c.l.bf16 %v1084
    %v1306 = vunpack.c.h.bf16 %v1084
    %v1307 = vunpack.c.l.bf16 %v1085
    %v1308 = vunpack.c.h.bf16 %v1085
    %v1309 = vunpack.c.l.bf16 %v1086
    %v1310 = vunpack.c.h.bf16 %v1086
    %v1311 = vunpack.c.l.bf16 %v1087
    %v1312 = vld [vmem:[%s12] sm:$0x7f]
    %v1314 = vperm.slane %v1312, 0
    %v1315 = vperm.slane %v1312, 1
    %v1316 = vperm.slane %v1312, 2
    %v1317 = vperm.slane %v1312, 3
    %v1318 = vperm.slane %v1312, 4
    %v1319 = vperm.slane %v1312, 5
    %v1320 = vperm.slane %v1312, 6
    %1328 = vmatpush.msra.mxu0 %v1193
    %1329 = vmatpush.msra.mxu0 %v1186
    %1330 = vmatpush.msra.mxu0 %v1179
    %1331 = vmatpush.msra.mxu0 %v1172
    %1332 = vmatpush.msra.mxu0 %v1165
    %1333 = vmatpush.msra.mxu0 %v1158
    %1334 = vmatpush.msra.mxu0 %v1151
    %1335 = vmatpush.msra.mxu0 %v1144
    %1336 = vmatpush.msra.mxu0 %v1137
    %1337 = vmatpush.msra.mxu0 %v1130
    %1338 = vmatpush.msra.mxu0 %v1123
    %1339 = vmatpush.msra.mxu0 %v1116
    %1340 = vmatpush.msra.mxu0 %v1109
    %1341 = vmatpush.msra.mxu0 %v1102
    %1342 = vmatpush.msra.mxu0 %v1095
    %1343 = vmatpush.msra.mxu0 %v1088
    %1344 = vmatmul.f32.gmra.mxu0 %v958
    %v1345 = vpop.f32.mrf.mxu0
    %v1346 = vadd.f32 %v1314, %v1345
    %1347 = vdwg.mxu0
    %1348 = vmatpush.msra.mxu0 %v1305
    %1349 = vmatpush.msra.mxu0 %v1298
    %1350 = vmatpush.msra.mxu0 %v1291
    %1351 = vmatpush.msra.mxu0 %v1284
    %1352 = vmatpush.msra.mxu0 %v1277
    %1353 = vmatpush.msra.mxu0 %v1270
    %1354 = vmatpush.msra.mxu0 %v1263
    %1355 = vmatpush.msra.mxu0 %v1256
    %1356 = vmatpush.msra.mxu0 %v1249
    %1357 = vmatpush.msra.mxu0 %v1242
    %1358 = vmatpush.msra.mxu0 %v1235
    %1359 = vmatpush.msra.mxu0 %v1228
    %1360 = vmatpush.msra.mxu0 %v1221
    %1361 = vmatpush.msra.mxu0 %v1214
    %1362 = vmatpush.msra.mxu0 %v1207
    %1363 = vmatpush.msra.mxu0 %v1200
    %1364 = vmatmul.f32.gmra.mxu0 %v959
    %v1365 = vpop.f32.mrf.mxu0
    %v1366 = vadd.f32 %v1346, %v1365
    %1367 = vdwg.mxu0
    %1368 = vmatpush.msra.mxu0 %v1194
    %1369 = vmatpush.msra.mxu0 %v1187
    %1370 = vmatpush.msra.mxu0 %v1180
    %1371 = vmatpush.msra.mxu0 %v1173
    %1372 = vmatpush.msra.mxu0 %v1166
    %1373 = vmatpush.msra.mxu0 %v1159
    %1374 = vmatpush.msra.mxu0 %v1152
    %1375 = vmatpush.msra.mxu0 %v1145
    %1376 = vmatpush.msra.mxu0 %v1138
    %1377 = vmatpush.msra.mxu0 %v1131
    %1378 = vmatpush.msra.mxu0 %v1124
    %1379 = vmatpush.msra.mxu0 %v1117
    %1380 = vmatpush.msra.mxu0 %v1110
    %1381 = vmatpush.msra.mxu0 %v1103
    %1382 = vmatpush.msra.mxu0 %v1096
    %1383 = vmatpush.msra.mxu0 %v1089
    %1384 = vmatmul.f32.gmra.mxu0 %v958
    %v1385 = vpop.f32.mrf.mxu0
    %v1386 = vadd.f32 %v1315, %v1385
    %1387 = vdwg.mxu0
    %1388 = vmatpush.msra.mxu0 %v1306
    %1389 = vmatpush.msra.mxu0 %v1299
    %1390 = vmatpush.msra.mxu0 %v1292
    %1391 = vmatpush.msra.mxu0 %v1285
    %1392 = vmatpush.msra.mxu0 %v1278
    %1393 = vmatpush.msra.mxu0 %v1271
    %1394 = vmatpush.msra.mxu0 %v1264
    %1395 = vmatpush.msra.mxu0 %v1257
    %1396 = vmatpush.msra.mxu0 %v1250
    %1397 = vmatpush.msra.mxu0 %v1243
    %1398 = vmatpush.msra.mxu0 %v1236
    %1399 = vmatpush.msra.mxu0 %v1229
    %1400 = vmatpush.msra.mxu0 %v1222
    %1401 = vmatpush.msra.mxu0 %v1215
    %1402 = vmatpush.msra.mxu0 %v1208
    %1403 = vmatpush.msra.mxu0 %v1201
    %1404 = vmatmul.f32.gmra.mxu0 %v959
    %v1405 = vpop.f32.mrf.mxu0
    %v1406 = vadd.f32 %v1386, %v1405
    %1407 = vdwg.mxu0
    %1408 = vmatpush.msra.mxu0 %v1195
    %1409 = vmatpush.msra.mxu0 %v1188
    %1410 = vmatpush.msra.mxu0 %v1181
    %1411 = vmatpush.msra.mxu0 %v1174
    %1412 = vmatpush.msra.mxu0 %v1167
    %1413 = vmatpush.msra.mxu0 %v1160
    %1414 = vmatpush.msra.mxu0 %v1153
    %1415 = vmatpush.msra.mxu0 %v1146
    %1416 = vmatpush.msra.mxu0 %v1139
    %1417 = vmatpush.msra.mxu0 %v1132
    %1418 = vmatpush.msra.mxu0 %v1125
    %1419 = vmatpush.msra.mxu0 %v1118
    %1420 = vmatpush.msra.mxu0 %v1111
    %1421 = vmatpush.msra.mxu0 %v1104
    %1422 = vmatpush.msra.mxu0 %v1097
    %1423 = vmatpush.msra.mxu0 %v1090
    %1424 = vmatmul.f32.gmra.mxu0 %v958
    %v1425 = vpop.f32.mrf.mxu0
    %v1426 = vadd.f32 %v1316, %v1425
    %1427 = vdwg.mxu0
    %1428 = vmatpush.msra.mxu0 %v1307
    %1429 = vmatpush.msra.mxu0 %v1300
    %1430 = vmatpush.msra.mxu0 %v1293
    %1431 = vmatpush.msra.mxu0 %v1286
    %1432 = vmatpush.msra.mxu0 %v1279
    %1433 = vmatpush.msra.mxu0 %v1272
    %1434 = vmatpush.msra.mxu0 %v1265
    %1435 = vmatpush.msra.mxu0 %v1258
    %1436 = vmatpush.msra.mxu0 %v1251
    %1437 = vmatpush.msra.mxu0 %v1244
    %1438 = vmatpush.msra.mxu0 %v1237
    %1439 = vmatpush.msra.mxu0 %v1230
    %1440 = vmatpush.msra.mxu0 %v1223
    %1441 = vmatpush.msra.mxu0 %v1216
    %1442 = vmatpush.msra.mxu0 %v1209
    %1443 = vmatpush.msra.mxu0 %v1202
    %1444 = vmatmul.f32.gmra.mxu0 %v959
    %v1445 = vpop.f32.mrf.mxu0
    %v1446 = vadd.f32 %v1426, %v1445
    %1447 = vdwg.mxu0
    %1448 = vmatpush.msra.mxu0 %v1196
    %1449 = vmatpush.msra.mxu0 %v1189
    %1450 = vmatpush.msra.mxu0 %v1182
    %1451 = vmatpush.msra.mxu0 %v1175
    %1452 = vmatpush.msra.mxu0 %v1168
    %1453 = vmatpush.msra.mxu0 %v1161
    %1454 = vmatpush.msra.mxu0 %v1154
    %1455 = vmatpush.msra.mxu0 %v1147
    %1456 = vmatpush.msra.mxu0 %v1140
    %1457 = vmatpush.msra.mxu0 %v1133
    %1458 = vmatpush.msra.mxu0 %v1126
    %1459 = vmatpush.msra.mxu0 %v1119
    %1460 = vmatpush.msra.mxu0 %v1112
    %1461 = vmatpush.msra.mxu0 %v1105
    %1462 = vmatpush.msra.mxu0 %v1098
    %1463 = vmatpush.msra.mxu0 %v1091
    %1464 = vmatmul.f32.gmra.mxu0 %v958
    %v1465 = vpop.f32.mrf.mxu0
    %v1466 = vadd.f32 %v1317, %v1465
    %1467 = vdwg.mxu0
    %1468 = vmatpush.msra.mxu0 %v1308
    %1469 = vmatpush.msra.mxu0 %v1301
    %1470 = vmatpush.msra.mxu0 %v1294
    %1471 = vmatpush.msra.mxu0 %v1287
    %1472 = vmatpush.msra.mxu0 %v1280
    %1473 = vmatpush.msra.mxu0 %v1273
    %1474 = vmatpush.msra.mxu0 %v1266
    %1475 = vmatpush.msra.mxu0 %v1259
    %1476 = vmatpush.msra.mxu0 %v1252
    %1477 = vmatpush.msra.mxu0 %v1245
    %1478 = vmatpush.msra.mxu0 %v1238
    %1479 = vmatpush.msra.mxu0 %v1231
    %1480 = vmatpush.msra.mxu0 %v1224
    %1481 = vmatpush.msra.mxu0 %v1217
    %1482 = vmatpush.msra.mxu0 %v1210
    %1483 = vmatpush.msra.mxu0 %v1203
    %1484 = vmatmul.f32.gmra.mxu0 %v959
    %v1485 = vpop.f32.mrf.mxu0
    %v1486 = vadd.f32 %v1466, %v1485
    %1487 = vdwg.mxu0
    %1488 = vmatpush.msra.mxu0 %v1197
    %1489 = vmatpush.msra.mxu0 %v1190
    %1490 = vmatpush.msra.mxu0 %v1183
    %1491 = vmatpush.msra.mxu0 %v1176
    %1492 = vmatpush.msra.mxu0 %v1169
    %1493 = vmatpush.msra.mxu0 %v1162
    %1494 = vmatpush.msra.mxu0 %v1155
    %1495 = vmatpush.msra.mxu0 %v1148
    %1496 = vmatpush.msra.mxu0 %v1141
    %1497 = vmatpush.msra.mxu0 %v1134
    %1498 = vmatpush.msra.mxu0 %v1127
    %1499 = vmatpush.msra.mxu0 %v1120
    %1500 = vmatpush.msra.mxu0 %v1113
    %1501 = vmatpush.msra.mxu0 %v1106
    %1502 = vmatpush.msra.mxu0 %v1099
    %1503 = vmatpush.msra.mxu0 %v1092
    %1504 = vmatmul.f32.gmra.mxu0 %v958
    %v1505 = vpop.f32.mrf.mxu0
    %v1506 = vadd.f32 %v1318, %v1505
    %1507 = vdwg.mxu0
    %1508 = vmatpush.msra.mxu0 %v1309
    %1509 = vmatpush.msra.mxu0 %v1302
    %1510 = vmatpush.msra.mxu0 %v1295
    %1511 = vmatpush.msra.mxu0 %v1288
    %1512 = vmatpush.msra.mxu0 %v1281
    %1513 = vmatpush.msra.mxu0 %v1274
    %1514 = vmatpush.msra.mxu0 %v1267
    %1515 = vmatpush.msra.mxu0 %v1260
    %1516 = vmatpush.msra.mxu0 %v1253
    %1517 = vmatpush.msra.mxu0 %v1246
    %1518 = vmatpush.msra.mxu0 %v1239
    %1519 = vmatpush.msra.mxu0 %v1232
    %1520 = vmatpush.msra.mxu0 %v1225
    %1521 = vmatpush.msra.mxu0 %v1218
    %1522 = vmatpush.msra.mxu0 %v1211
    %1523 = vmatpush.msra.mxu0 %v1204
    %1524 = vmatmul.f32.gmra.mxu0 %v959
    %v1525 = vpop.f32.mrf.mxu0
    %v1526 = vadd.f32 %v1506, %v1525
    %1527 = vdwg.mxu0
    %1528 = vmatpush.msra.mxu0 %v1198
    %1529 = vmatpush.msra.mxu0 %v1191
    %1530 = vmatpush.msra.mxu0 %v1184
    %1531 = vmatpush.msra.mxu0 %v1177
    %1532 = vmatpush.msra.mxu0 %v1170
    %1533 = vmatpush.msra.mxu0 %v1163
    %1534 = vmatpush.msra.mxu0 %v1156
    %1535 = vmatpush.msra.mxu0 %v1149
    %1536 = vmatpush.msra.mxu0 %v1142
    %1537 = vmatpush.msra.mxu0 %v1135
    %1538 = vmatpush.msra.mxu0 %v1128
    %1539 = vmatpush.msra.mxu0 %v1121
    %1540 = vmatpush.msra.mxu0 %v1114
    %1541 = vmatpush.msra.mxu0 %v1107
    %1542 = vmatpush.msra.mxu0 %v1100
    %1543 = vmatpush.msra.mxu0 %v1093
    %1544 = vmatmul.f32.gmra.mxu0 %v958
    %v1545 = vpop.f32.mrf.mxu0
    %v1546 = vadd.f32 %v1319, %v1545
    %1547 = vdwg.mxu0
    %1548 = vmatpush.msra.mxu0 %v1310
    %1549 = vmatpush.msra.mxu0 %v1303
    %1550 = vmatpush.msra.mxu0 %v1296
    %1551 = vmatpush.msra.mxu0 %v1289
    %1552 = vmatpush.msra.mxu0 %v1282
    %1553 = vmatpush.msra.mxu0 %v1275
    %1554 = vmatpush.msra.mxu0 %v1268
    %1555 = vmatpush.msra.mxu0 %v1261
    %1556 = vmatpush.msra.mxu0 %v1254
    %1557 = vmatpush.msra.mxu0 %v1247
    %1558 = vmatpush.msra.mxu0 %v1240
    %1559 = vmatpush.msra.mxu0 %v1233
    %1560 = vmatpush.msra.mxu0 %v1226
    %1561 = vmatpush.msra.mxu0 %v1219
    %1562 = vmatpush.msra.mxu0 %v1212
    %1563 = vmatpush.msra.mxu0 %v1205
    %1564 = vmatmul.f32.gmra.mxu0 %v959
    %v1565 = vpop.f32.mrf.mxu0
    %v1566 = vadd.f32 %v1546, %v1565
    %1567 = vdwg.mxu0
    %1568 = vmatpush.msra.mxu0 %v1199
    %1569 = vmatpush.msra.mxu0 %v1192
    %1570 = vmatpush.msra.mxu0 %v1185
    %1571 = vmatpush.msra.mxu0 %v1178
    %1572 = vmatpush.msra.mxu0 %v1171
    %1573 = vmatpush.msra.mxu0 %v1164
    %1574 = vmatpush.msra.mxu0 %v1157
    %1575 = vmatpush.msra.mxu0 %v1150
    %1576 = vmatpush.msra.mxu0 %v1143
    %1577 = vmatpush.msra.mxu0 %v1136
    %1578 = vmatpush.msra.mxu0 %v1129
    %1579 = vmatpush.msra.mxu0 %v1122
    %1580 = vmatpush.msra.mxu0 %v1115
    %1581 = vmatpush.msra.mxu0 %v1108
    %1582 = vmatpush.msra.mxu0 %v1101
    %1583 = vmatpush.msra.mxu0 %v1094
    %1584 = vmatmul.f32.gmra.mxu0 %v958
    %v1585 = vpop.f32.mrf.mxu0
    %v1586 = vadd.f32 %v1320, %v1585
    %1587 = vdwg.mxu0
    %1588 = vmatpush.msra.mxu0 %v1311
    %1589 = vmatpush.msra.mxu0 %v1304
    %1590 = vmatpush.msra.mxu0 %v1297
    %1591 = vmatpush.msra.mxu0 %v1290
    %1592 = vmatpush.msra.mxu0 %v1283
    %1593 = vmatpush.msra.mxu0 %v1276
    %1594 = vmatpush.msra.mxu0 %v1269
    %1595 = vmatpush.msra.mxu0 %v1262
    %1596 = vmatpush.msra.mxu0 %v1255
    %1597 = vmatpush.msra.mxu0 %v1248
    %1598 = vmatpush.msra.mxu0 %v1241
    %1599 = vmatpush.msra.mxu0 %v1234
    %1600 = vmatpush.msra.mxu0 %v1227
    %1601 = vmatpush.msra.mxu0 %v1220
    %1602 = vmatpush.msra.mxu0 %v1213
    %1603 = vmatpush.msra.mxu0 %v1206
    %1604 = vmatmul.f32.gmra.mxu0 %v959
    %v1605 = vpop.f32.mrf.mxu0
    %v1606 = vadd.f32 %v1586, %v1605
    %1607 = vdwg.mxu0
    %v1608 = vmax.f32 %v1366, 0.0
    %v1609 = vmax.f32 %v1406, 0.0
    %v1610 = vmax.f32 %v1446, 0.0
    %v1611 = vmax.f32 %v1486, 0.0
    %v1612 = vmax.f32 %v1526, 0.0
    %v1613 = vmax.f32 %v1566, 0.0
    %v1614 = vmax.f32 %v1606, 0.0
    %1615 = vst [vmem:[#allocation2] sm:$0xff] %v1608
    %1616 = vst [vmem:[#allocation2 + $0x8] sm:$0xff] %v1609
    %1617 = vst [vmem:[#allocation2 + $0x10] sm:$0xff] %v1610
    %1618 = vst [vmem:[#allocation2 + $0x18] sm:$0xff] %v1611
    %1619 = vst [vmem:[#allocation2 + $0x20] sm:$0xff] %v1612
    %1620 = vst [vmem:[#allocation2 + $0x28] sm:$0xff] %v1613
    %1621 = vst.msk [vmem:[#allocation2 + $0x30] sm:$0xff] %vm355, %v1614
    %1622 = vst [vmem:[#allocation4] sm:$0xff] %v806
    // Predicated region
    $region54: #{tpu_custom_call.1} parent=1 // pred_check
      _
    $region55: #{tpu_custom_call.1} parent=1 // pred_check_branch
      %1624 = sbr.rel (0) target = $region57
    $region56: #{tpu_custom_call.1} parent=1 // pred_region
      %1626 = vsyncadd [#allocation3], 0
      %s1628 = sshll.u32 [#allocation2], 4
      %s1629 = int_to_ptr.vmem [resolvable:$true] %s1628
      %s1630 = sshll.u32 %s13, 4
      %s1631 = int_to_ptr.hbm [resolvable:$true] %s1630
      %1633 = dma.vmem_to_hbm [thread:$0]  %s1629, 896, %s1631, [#allocation3]
    $region57: #{tpu_custom_call.1} parent=1 // pred_fallthru
      _
    // Predicated region
    $region58: #{tpu_custom_call.1} parent=1 // pred_check
      _
    $region59: #{tpu_custom_call.1} parent=1 // pred_check_branch
      %1635 = sbr.rel (0) target = $region61
    $region60: #{tpu_custom_call.1} parent=1 // pred_region
      %1637 = vsyncadd [#allocation5], 0
      %s1639 = sshll.u32 [#allocation4], 4
      %s1640 = int_to_ptr.vmem [resolvable:$true] %s1639
      %s1641 = sshll.u32 %s14, 4
      %s1642 = int_to_ptr.hbm [resolvable:$true] %s1641
      %1644 = dma.vmem_to_hbm [thread:$0]  %s1640, 128, %s1642, [#allocation5]
    $region61: #{tpu_custom_call.1} parent=1 // pred_fallthru
      _
    // Predicated region
    $region62: #{tpu_custom_call.1} parent=1 // pred_check
      _
    $region63: #{tpu_custom_call.1} parent=1 // pred_check_branch
      %1646 = sbr.rel (0) target = $region65
    $region64: #{tpu_custom_call.1} parent=1 // pred_region
      %1648 = dma.done [#allocation3], 896
    $region65: #{tpu_custom_call.1} parent=1 // pred_fallthru
      _
    // Predicated region
    $region66: #{tpu_custom_call.1} parent=1 // pred_check
      _
    $region67: #{tpu_custom_call.1} parent=1 // pred_check_branch
      %1650 = sbr.rel (0) target = $region69
    $region68: #{tpu_custom_call.1} parent=1 // pred_region
      %1652 = dma.done [#allocation5], 128
    $region69: #{tpu_custom_call.1} parent=1 // pred_fallthru
      _
    %1653 = vsyncpa [#allocation3], 1
    %1654 = vsyncpa [#allocation5], 1

</llo_original>
